<compile_context>
chip_gen: v7x
topology: tpu7x:2x2x1
jax: 0.10.0
libtpu: 0.0.40
codegen_flags: <defaults>
</compile_context>

<pallas_src>
import functools

import jax
import jax.numpy as jnp
from jax.experimental import pallas as pl
from jax.experimental.pallas import tpu as pltpu


_VMEM_LIMIT = 32 * 1024 * 1024   # v7x-safe scoped-VMEM cap (64 MiB physical/TC)


def _round_up(x, m):
    return ((x + m - 1) // m) * m


def _pick_tile(dim, want, align):
    """Return (tile, padded_dim).  Prefer a tile that divides `dim` so no
    HBM-side jnp.pad of the operand is emitted; pad only as a last resort."""
    if dim <= want:
        return dim, dim
    t = max(align, (want // align) * align)
    s = t
    while s >= align:
        if dim % s == 0:
            return s, dim
        s -= align
    return t, _round_up(dim, t)


# ---------------------------------------------------------------------------
# Fused stride-1 conv kernel: sum of KH*KW shifted matmuls on an in-VMEM slab.
# ---------------------------------------------------------------------------
def _conv_fused_kernel(x_ref, w_ref, b_ref, o_ref, *, taps):
    # x_ref: (Cin, Lp)      flattened zero-padded image (one n)
    # w_ref: (KH*KW, tcout, Cin)  per-tap weight slabs
    # b_ref: (tcout, 1)     f32 bias column
    # o_ref: (tcout, Lw)    "wide" output, Lw = Ho*Wp (garbage cols sliced off
    #                        outside the kernel)
    lw = o_ref.shape[-1]
    acc = jnp.dot(w_ref[0], x_ref[:, pl.ds(taps[0], lw)],
                  preferred_element_type=jnp.float32)
    for t in range(1, len(taps)):
        acc = acc + jnp.dot(w_ref[t], x_ref[:, pl.ds(taps[t], lw)],
                            preferred_element_type=jnp.float32)
    o_ref[...] = (acc + b_ref[...]).astype(o_ref.dtype)


def conv2d_fused(x, w_taps, b_col, stride, padding, KH, KW, *,
                 out_dtype=None, tcout_max=256):
    """Fused im2col-free conv for stride == 1.

    x:      (N, Cin, H, W)   NCHW
    w_taps: (KH*KW, Cout, Cin)   (weights pre-arranged per tap)
    b_col:  (Cout, 1) f32
    Returns (N, Cout, Ho, Wo) NCHW.
    """
    assert stride == 1
    N, Cin, H, W = x.shape
    T, Cout, Cin_w = w_taps.shape
    assert Cin_w == Cin and T == KH * KW
    out_dtype = out_dtype or x.dtype

    Ho = H + 2 * padding - KH + 1
    Wo = W + 2 * padding - KW + 1
    Hp, Wp = H + 2 * padding, W + 2 * padding
    Lw = Ho * Wp                       # "wide" output row length
    Lp = Hp * Wp + (KW - 1)            # flattened padded image (+ tail pad)

    xp = jnp.pad(x, ((0, 0), (0, 0), (padding, padding), (padding, padding)))
    xpf = xp.reshape(N, Cin, Hp * Wp)
    if KW > 1:
        xpf = jnp.pad(xpf, ((0, 0), (0, 0), (0, KW - 1)))

    if Cout <= tcout_max:
        tcout, Coutp = Cout, Cout
    else:
        tcout = tcout_max
        Coutp = _round_up(Cout, tcout)
    if Coutp != Cout:
        w_taps = jnp.pad(w_taps, ((0, 0), (0, Coutp - Cout), (0, 0)))
        b_col = jnp.pad(b_col, ((0, Coutp - Cout), (0, 0)))

    taps = tuple(kh * Wp + kw for kh in range(KH) for kw in range(KW))
    kernel = functools.partial(_conv_fused_kernel, taps=taps)

    out_wide = pl.pallas_call(
        kernel,
        out_shape=jax.ShapeDtypeStruct((N, Coutp, Lw), out_dtype),
        grid_spec=pltpu.PrefetchScalarGridSpec(
            num_scalar_prefetch=0,
            grid=(N, Coutp // tcout),
            in_specs=[pl.BlockSpec((None, Cin, Lp), lambda n, i: (n, 0, 0)),
                      pl.BlockSpec((T, tcout, Cin), lambda n, i: (0, i, 0)),
                      pl.BlockSpec((tcout, 1), lambda n, i: (i, 0))],
            out_specs=pl.BlockSpec((None, tcout, Lw), lambda n, i: (n, i, 0))),
        compiler_params=pltpu.CompilerParams(
            dimension_semantics=("parallel", "parallel"),
            vmem_limit_bytes=_VMEM_LIMIT),
    )(xpf, w_taps, b_col)

    out = out_wide.reshape(N, Coutp, Ho, Wp)[:, :Cout, :, :Wo]
    return out


# ---------------------------------------------------------------------------
# GEMM + row-bias kernels (fallback conv path & generic use).
# ---------------------------------------------------------------------------
def _gemm_bias_kernel_1k(a_ref, b_ref, bias_ref, o_ref):
    # Single-K-tile specialization: no scratch, no zero-init/re-read passes.
    o_ref[...] = (jnp.dot(a_ref[...], b_ref[...],
                          preferred_element_type=jnp.float32)
                  + bias_ref[...]).astype(o_ref.dtype)


def _gemm_bias_kernel_acc(a_ref, b_ref, bias_ref, o_ref, acc_ref):
    @pl.when(pl.program_id(2) == 0)
    def _():
        acc_ref[...] = jnp.zeros_like(acc_ref)

    acc_ref[...] += jnp.dot(a_ref[...], b_ref[...],
                            preferred_element_type=jnp.float32)

    @pl.when(pl.program_id(2) == pl.num_programs(2) - 1)
    def _():
        o_ref[...] = (acc_ref[...] + bias_ref[...]).astype(o_ref.dtype)


def gemm_bias(a, b, bias, *, tr=256, tc=1024, tk=1024,
              out_dtype=None, compute_dtype=None):
    """out[R, C] = a[R, K] @ b[K, C] + bias[R] (bias broadcast over columns)."""
    R, K = a.shape
    Kb, C = b.shape
    assert Kb == K, (a.shape, b.shape)
    out_dtype = out_dtype or a.dtype
    if compute_dtype is not None:
        a = a.astype(compute_dtype)
        b = b.astype(compute_dtype)
    sub_align = 16 if jnp.dtype(a.dtype).itemsize == 2 else 8
    bias = jnp.asarray(bias, jnp.float32).reshape(R, 1)

    tr_, Rp = _pick_tile(R, tr, sub_align)
    tc_, Cp = _pick_tile(C, tc, 128)
    tk_, Kp = _pick_tile(K, tk, max(sub_align, 128) if K > tk else sub_align)

    if Rp != R:
        a = jnp.pad(a, ((0, Rp - R), (0, 0)))
        bias = jnp.pad(bias, ((0, Rp - R), (0, 0)))
    if Kp != K:
        a = jnp.pad(a, ((0, 0), (0, Kp - K)))
        b = jnp.pad(b, ((0, Kp - K), (0, 0)))
    if Cp != C:
        b = jnp.pad(b, ((0, 0), (0, Cp - C)))

    if Kp // tk_ == 1:
        out = pl.pallas_call(
            _gemm_bias_kernel_1k,
            out_shape=jax.ShapeDtypeStruct((Rp, Cp), out_dtype),
            grid_spec=pltpu.PrefetchScalarGridSpec(
                num_scalar_prefetch=0,
                grid=(Rp // tr_, Cp // tc_),
                in_specs=[pl.BlockSpec((tr_, Kp), lambda i, j: (i, 0)),
                          pl.BlockSpec((Kp, tc_), lambda i, j: (0, j)),
                          pl.BlockSpec((tr_, 1), lambda i, j: (i, 0))],
                out_specs=pl.BlockSpec((tr_, tc_), lambda i, j: (i, j))),
            compiler_params=pltpu.CompilerParams(
                dimension_semantics=("parallel", "parallel"),
                vmem_limit_bytes=_VMEM_LIMIT),
        )(a, b, bias)
    else:
        out = pl.pallas_call(
            _gemm_bias_kernel_acc,
            out_shape=jax.ShapeDtypeStruct((Rp, Cp), out_dtype),
            grid_spec=pltpu.PrefetchScalarGridSpec(
                num_scalar_prefetch=0,
                grid=(Rp // tr_, Cp // tc_, Kp // tk_),
                in_specs=[pl.BlockSpec((tr_, tk_), lambda i, j, k: (i, k)),
                          pl.BlockSpec((tk_, tc_), lambda i, j, k: (k, j)),
                          pl.BlockSpec((tr_, 1), lambda i, j, k: (i, 0))],
                out_specs=pl.BlockSpec((tr_, tc_), lambda i, j, k: (i, j)),
                scratch_shapes=[pltpu.VMEM((tr_, tc_), jnp.float32)]),
            compiler_params=pltpu.CompilerParams(
                dimension_semantics=("parallel", "parallel", "arbitrary"),
                vmem_limit_bytes=_VMEM_LIMIT),
        )(a, b, bias)

    if Rp != R or Cp != C:
        out = out[:R, :C]
    return out


# ---------------------------------------------------------------------------
# Linear kernel: y = x @ W^T + b with the RHS transposed inside the kernel.
# ---------------------------------------------------------------------------
def _linear_kernel(x_ref, w_ref, b_ref, o_ref):
    o_ref[...] = (jnp.dot(x_ref[...], w_ref[...].T,
                          preferred_element_type=jnp.float32)
                  + b_ref[...]).astype(o_ref.dtype)


def linear_bias(x, w, b, *, tb=256, tf=256, out_dtype=None):
    """x: (B, In); w: (F, In); b: (F,).  Returns (B, F) = x @ w.T + b."""
    B, In = x.shape
    F, In2 = w.shape
    assert In2 == In
    out_dtype = out_dtype or x.dtype
    tb_, Bp = _pick_tile(B, tb, 8)
    tf_, Fp = _pick_tile(F, tf, 128)
    if Bp != B:
        x = jnp.pad(x, ((0, Bp - B), (0, 0)))
    if Fp != F:
        w = jnp.pad(w, ((0, Fp - F), (0, 0)))
        b = jnp.pad(jnp.asarray(b), (0, Fp - F))
    brow = jnp.asarray(b, jnp.float32).reshape(1, Fp)
    # TODO(synk): tile the In (K) axis too for very large fan-in linears.
    out = pl.pallas_call(
        _linear_kernel,
        out_shape=jax.ShapeDtypeStruct((Bp, Fp), out_dtype),
        grid_spec=pltpu.PrefetchScalarGridSpec(
            num_scalar_prefetch=0,
            grid=(Bp // tb_, Fp // tf_),
            in_specs=[pl.BlockSpec((tb_, In), lambda i, j: (i, 0)),
                      pl.BlockSpec((tf_, In), lambda i, j: (j, 0)),
                      pl.BlockSpec((1, tf_), lambda i, j: (0, j))],
            out_specs=pl.BlockSpec((tb_, tf_), lambda i, j: (i, j))),
        compiler_params=pltpu.CompilerParams(
            dimension_semantics=("parallel", "parallel"),
            vmem_limit_bytes=_VMEM_LIMIT),
    )(x, w, brow)
    if Bp != B or Fp != F:
        out = out[:B, :F]
    return out


# ---------------------------------------------------------------------------
# Global average pooling: lane-dense (N*C, H*W) row reduction.
# ---------------------------------------------------------------------------
def _gap_kernel(x_ref, o_ref):
    o_ref[...] = jnp.sum(x_ref[...], axis=-1, keepdims=True) \
        * (1.0 / x_ref.shape[-1])


def global_avg_pool_nchw(x):
    """AdaptiveAvgPool2d((1, 1)) on an NCHW activation.  Returns (N, C, 1, 1)."""
    N, C, H, W = x.shape
    hw = H * W
    R = N * C
    x2 = x.reshape(R, hw)                       # free, contiguous reshape
    budget = max(8, ((4 * 1024 * 1024) // (4 * hw)) // 8 * 8)
    if R <= budget:
        rows, Rp = R, R
    else:
        rows, Rp = _pick_tile(R, budget, 8)
    if Rp != R:
        x2 = jnp.pad(x2, ((0, Rp - R), (0, 0)))
    pooled = pl.pallas_call(
        _gap_kernel,
        out_shape=jax.ShapeDtypeStruct((Rp, 1), jnp.float32),
        grid_spec=pl.GridSpec(
            grid=(Rp // rows,),
            in_specs=[pl.BlockSpec((rows, hw), lambda i: (i, 0))],
            out_specs=pl.BlockSpec((rows, 1), lambda i: (i, 0))),
        compiler_params=pltpu.CompilerParams(
            dimension_semantics=("parallel",)),
    )(x2)
    return pooled[:R].reshape(N, C, 1, 1)


# ---------------------------------------------------------------------------
# Conv dispatch: fused stride-1 path with im2col fallback.
# ---------------------------------------------------------------------------
_FUSED_CONV_OK = None


def _fused_conv_selftest():
    """One-time tiny check that the fused conv kernel lowers + matches XLA;
    on any failure the model transparently uses the im2col fallback."""
    global _FUSED_CONV_OK
    if _FUSED_CONV_OK is None:
        try:
            k = jax.random.PRNGKey(42)
            xt = jax.random.normal(k, (1, 4, 8, 8), jnp.float32)
            wt = jax.random.normal(jax.random.fold_in(k, 1), (8, 4, 3, 3),
                                   jnp.float32)
            bt = jnp.zeros((8, 1), jnp.float32)
            w_taps = jnp.transpose(wt, (2, 3, 0, 1)).reshape(9, 8, 4)
            y = conv2d_fused(xt, w_taps, bt, 1, 1, 3, 3)
            ref = jax.lax.conv_general_dilated(
                xt, wt, (1, 1), [(1, 1), (1, 1)],
                dimension_numbers=('NCHW', 'OIHW', 'NCHW'),
                precision=jax.lax.Precision.HIGHEST)
            _FUSED_CONV_OK = bool(jnp.allclose(y, ref, atol=1e-3, rtol=1e-3))
        except Exception:
            _FUSED_CONV_OK = False
    return _FUSED_CONV_OK


def conv2d_im2col(x, w, b, stride, padding, *, compute_dtype=None):
    """Fallback conv (stride > 1 or oversized images): im2col + tiled GEMM."""
    N, Cin, H, W = x.shape
    Cout, _, KH, KW = w.shape
    Ho = (H + 2 * padding - KH) // stride + 1
    Wo = (W + 2 * padding - KW) // stride + 1
    xc = jnp.transpose(x, (1, 0, 2, 3))                     # CNHW
    xp = jnp.pad(xc, ((0, 0), (0, 0), (padding, padding), (padding, padding)))
    taps = []
    for i in range(KH):
        for j in range(KW):
            taps.append(xp[:, :, i:i + stride * Ho:stride,
                               j:j + stride * Wo:stride])
    pT = jnp.stack(taps, axis=1).reshape(Cin * KH * KW, N * Ho * Wo)
    wmat = w.reshape(Cout, Cin * KH * KW)
    outT = gemm_bias(wmat, pT, b, out_dtype=x.dtype,
                     compute_dtype=compute_dtype)            # (Cout, M)
    return jnp.transpose(outT.reshape(Cout, N, Ho, Wo), (1, 0, 2, 3))


def conv2d_nchw(x, params, *, compute_dtype=None):
    w = params['w']
    stride, padding = params['stride'], params['padding']
    N, Cin, H, W = x.shape
    Cout, _, KH, KW = w.shape
    if stride == 1 and _fused_conv_selftest():
        Ho = H + 2 * padding - KH + 1
        Wo = W + 2 * padding - KW + 1
        Hp, Wp = H + 2 * padding, W + 2 * padding
        Lp, Lw = Hp * Wp + (KW - 1), Ho * Wp
        tcout = min(Cout, 256)
        # double-buffered per-step working set estimate (bytes)
        est = 4 * (2 * Cin * Lp + 2 * tcout * Lw + KH * KW * Cout * Cin)
        # TODO(synk): tile Ho with a halo (pl.Element / manual DMA) instead of
        # falling back for very large spatial sizes.
        if est <= 24 * 1024 * 1024:
            xin = x if compute_dtype is None else x.astype(compute_dtype)
            wt = (params['w_taps'] if compute_dtype is None
                  else params['w_taps'].astype(compute_dtype))
            return conv2d_fused(xin, wt, params['b_col'], stride, padding,
                                KH, KW, out_dtype=x.dtype)
    return conv2d_im2col(x, w, params['b'], stride, padding,
                         compute_dtype=compute_dtype)


# ---------------------------------------------------------------------------
# Config objects mirroring all_conv_info / each_conv_info
# ---------------------------------------------------------------------------
class EachConvInfo:
    def __init__(self, layer_type, layer_sub_type, in_ch=None,
                 number_of_filters=None, kernel_size=None, padding=0,
                 stride=1, weight_init_type='XAVIER_NORMAL',
                 num_nodes_in_fc=None):
        self.layer_type = layer_type
        self.layer_sub_type = layer_sub_type
        self.in_ch = in_ch
        self.number_of_filters = number_of_filters
        self.kernel_size = kernel_size
        self.padding = padding
        self.stride = stride
        self.weight_init_type = weight_init_type
        self.num_nodes_in_fc = num_nodes_in_fc


class AllConvInfo:
    def __init__(self, input_image_size, list_of_each_conv_info):
        self.input_image_size = input_image_size
        self.list_of_each_conv_info = list_of_each_conv_info


def _conv_out_size(in_size, padding, kernel, stride):
    return tuple((s + 2 * padding - kernel) // stride + 1 for s in in_size)


# ---------------------------------------------------------------------------
# DLGN_CONV_LinearNetwork (JAX / Pallas)
# ---------------------------------------------------------------------------
class DLGN_CONV_LinearNetwork:
    def __init__(self, gate_net_conv_info, seed, is_enable_weight_restore=False,
                 compute_dtype=None):
        self.gate_net_conv_info = gate_net_conv_info
        self.seed = seed
        self.is_enable_weight_restore = is_enable_weight_restore
        self.compute_dtype = compute_dtype     # e.g. jnp.bfloat16 (f32 default)
        key = jax.random.PRNGKey(seed)

        self.module_list = []
        input_size = gate_net_conv_info.input_image_size
        last_out_ch = None
        last_output_size = None
        last_fc_nodes = None

        for info in gate_net_conv_info.list_of_each_conv_info:
            if info.layer_type == 'CONV' and info.layer_sub_type == '2D':
                in_ch = info.in_ch if last_out_ch is None else last_out_ch
                key, wk, bk = jax.random.split(key, 3)
                ks = info.kernel_size
                fan_in = in_ch * ks * ks
                fan_out = info.number_of_filters * ks * ks
                std = (2.0 / (fan_in + fan_out)) ** 0.5       # xavier_normal
                w = std * jax.random.normal(
                    wk, (info.number_of_filters, in_ch, ks, ks), jnp.float32)
                bound = 1.0 / (fan_in ** 0.5)                 # Conv2d default
                b = jax.random.uniform(bk, (info.number_of_filters,),
                                       jnp.float32, -bound, bound)
                w_taps = jnp.transpose(w, (2, 3, 0, 1)).reshape(
                    ks * ks, info.number_of_filters, in_ch)
                self.module_list.append(
                    ('CONV2D', dict(w=w, b=b, w_taps=w_taps,
                                    b_col=b.reshape(-1, 1).astype(jnp.float32),
                                    stride=info.stride, padding=info.padding)))
                last_out_ch = info.number_of_filters
                last_output_size = _conv_out_size(
                    input_size, info.padding, ks, info.stride)
                input_size = last_output_size
            elif (info.layer_type == 'POOL'
                  and info.layer_sub_type == 'GLOBAL_AVERAGE'):
                self.module_list.append(('GAP', None))
                last_output_size = (1, 1)
                input_size = last_output_size
            elif (info.layer_type == 'FULLY-CONNECTED'
                  and info.layer_sub_type == 'LINEAR'):
                if last_fc_nodes is None:
                    inp_size = (last_output_size[0] * last_output_size[1]
                                * last_out_ch)
                else:
                    inp_size = last_fc_nodes
                key, wk, bk = jax.random.split(key, 3)
                std = (2.0 / (inp_size + info.num_nodes_in_fc)) ** 0.5
                w = std * jax.random.normal(
                    wk, (info.num_nodes_in_fc, inp_size), jnp.float32)
                bound = 1.0 / (inp_size ** 0.5)
                b = jax.random.uniform(bk, (info.num_nodes_in_fc,),
                                       jnp.float32, -bound, bound)
                self.module_list.append(('LINEAR', dict(w=w, b=b)))
                last_fc_nodes = info.num_nodes_in_fc
            # TODO(synk): ACTIVATION layers depend on the undefined
            # get_activation_function_from_key() in the reference; omitted.

    def forward(self, inp, verbose=2):
        """inp: NCHW float32.  Returns (each_mod_outputs, previous_output)
        with PyTorch-layout (NCHW) tensors, like the reference module."""
        each_mod_outputs = [None] * len(self.module_list)
        prev = inp                                  # chain stays in NCHW
        for indx, (kind, params) in enumerate(self.module_list):
            if kind == 'CONV2D':
                prev = conv2d_nchw(prev, params,
                                   compute_dtype=self.compute_dtype)
            elif kind == 'GAP':
                # TODO(synk): could be fused into the preceding conv's GEMM
                # epilogue (per-row partial sums) to skip one activation read.
                prev = global_avg_pool_nchw(prev).astype(prev.dtype)
            elif kind == 'LINEAR':
                # nn.Linear semantics: applied to the last dim of the
                # PyTorch-layout input, as one transposed-RHS GEMM (no x.T /
                # y.T HBM copies).
                lead = prev.shape[:-1]
                flat = prev.reshape(-1, prev.shape[-1])
                y = linear_bias(flat, params['w'], params['b'])
                prev = y.reshape(lead + (params['w'].shape[0],))
                # TODO(synk): CONV after LINEAR unsupported (the reference
                # forward is shape-inconsistent there as well).
            each_mod_outputs[indx] = prev
        return each_mod_outputs, prev


# ---------------------------------------------------------------------------
if __name__ == "__main__":
    key = jax.random.PRNGKey(0)
    x = jax.random.normal(key, (2, 4, 16, 16), jnp.float32)   # NCHW

    # TODO(synk): a FULLY-CONNECTED layer after the pool is shape-inconsistent
    # in the reference forward (no flatten in module_list), so the demo config
    # uses the conv + global-average-pool gating-net path only.
    cfg = AllConvInfo(
        input_image_size=(16, 16),
        list_of_each_conv_info=[
            EachConvInfo(layer_type='CONV', layer_sub_type='2D', in_ch=4,
                         number_of_filters=8, kernel_size=3, padding=1,
                         stride=1, weight_init_type='XAVIER_NORMAL'),
            EachConvInfo(layer_type='CONV', layer_sub_type='2D', in_ch=8,
                         number_of_filters=16, kernel_size=3, padding=1,
                         stride=1, weight_init_type='XAVIER_NORMAL'),
            EachConvInfo(layer_type='POOL', layer_sub_type='GLOBAL_AVERAGE'),
        ])

    # Resolve the fused-conv path once (eagerly) before tracing the jit.
    _fused_conv_selftest()

    net = DLGN_CONV_LinearNetwork(cfg, seed=0)
    fwd = jax.jit(net.forward)
    each_mod_outputs, final = fwd(x)
    for o in each_mod_outputs:
        jax.block_until_ready(o)
    jax.block_until_ready(final)

    assert each_mod_outputs[0].shape == (2, 8, 16, 16)
    assert each_mod_outputs[1].shape == (2, 16, 16, 16)
    assert final.shape == (2, 16, 1, 1)

    # Pure-JAX reference check (lax conv + mean) for numerical correctness.
    def ref_conv(xr, w, b, stride, padding):
        y = jax.lax.conv_general_dilated(
            xr, w, window_strides=(stride, stride),
            padding=[(padding, padding), (padding, padding)],
            dimension_numbers=('NCHW', 'OIHW', 'NCHW'),
            precision=jax.lax.Precision.HIGHEST)
        return y + b.reshape(1, -1, 1, 1)

    p0 = net.module_list[0][1]
    p1 = net.module_list[1][1]
    r1 = ref_conv(x, p0['w'], p0['b'], p0['stride'], p0['padding'])
    r2 = ref_conv(r1, p1['w'], p1['b'], p1['stride'], p1['padding'])
    r3 = jnp.mean(r2, axis=(2, 3), keepdims=True)
    assert jnp.allclose(each_mod_outputs[0], r1, atol=1e-3, rtol=1e-3)
    assert jnp.allclose(each_mod_outputs[1], r2, atol=1e-3, rtol=1e-3)
    assert jnp.allclose(final, r3, atol=1e-3, rtol=1e-3)

    # Sanity check of the transposed-RHS linear kernel (module's LINEAR path).
    kx, kw_, kb = jax.random.split(jax.random.PRNGKey(1), 3)
    xb = jax.random.normal(kx, (8, 64), jnp.float32)
    wl = 0.1 * jax.random.normal(kw_, (32, 64), jnp.float32)
    bl = 0.1 * jax.random.normal(kb, (32,), jnp.float32)
    yl = linear_bias(xb, wl, bl)
    jax.block_until_ready(yl)
    assert jnp.allclose(yl, xb @ wl.T + bl, atol=1e-4, rtol=1e-4)

    print("KERNEL_OK")
</pallas_src>

<mosaic_0001>
module attributes {stable_mosaic.version = 11 : i64} {
  func.func @_conv_fused_kernel(%arg0: i32, %arg1: i32, %arg2: memref<1x4x102xf32, #tpu.memory_space<vmem>>, %arg3: memref<9x8x4xf32, #tpu.memory_space<vmem>>, %arg4: memref<8x1xf32, #tpu.memory_space<vmem>>, %arg5: memref<1x8x80xf32, #tpu.memory_space<vmem>>) attributes {dimension_semantics = [#tpu.dimension_semantics<parallel>, #tpu.dimension_semantics<parallel>], iteration_bounds = array<i64: 1, 1>, scalar_prefetch = 0 : i64, scratch_operands = 0 : i64, tpu.core_type = #tpu.core_type<tc>, window_params = [{transform_indices = @transform_0, window_bounds = array<i64: 1, 4, 102>}, {transform_indices = @transform_1, window_bounds = array<i64: 9, 8, 4>}, {transform_indices = @transform_2, window_bounds = array<i64: 8, 1>}, {transform_indices = @transform_3, window_bounds = array<i64: 1, 8, 80>}]} {
    %c0 = arith.constant 0 : index
    %c0_0 = arith.constant 0 : index
    %c0_1 = arith.constant 0 : index
    %0 = vector.load %arg3[%c0, %c0_0, %c0_1] : memref<9x8x4xf32, #tpu.memory_space<vmem>>, vector<1x8x4xf32>
    %1 = vector.shape_cast %0 : vector<1x8x4xf32> to vector<8x4xf32>
    %c0_2 = arith.constant 0 : index
    %c0_3 = arith.constant 0 : index
    %c0_4 = arith.constant 0 : index
    %2 = vector.load %arg2[%c0_2, %c0_3, %c0_4] : memref<1x4x102xf32, #tpu.memory_space<vmem>>, vector<1x4x80xf32>
    %3 = vector.shape_cast %2 : vector<1x4x80xf32> to vector<4x80xf32>
    %cst = arith.constant dense<0.000000e+00> : vector<8x80xf32>
    %4 = tpu.matmul %1, %3, %cst {dimension_numbers = #tpu.dot_dimension_numbers<[1], [0], [0], [1], [0, 0, 1, 1], [], []>} : vector<8x4xf32>, vector<4x80xf32>, vector<8x80xf32> -> vector<8x80xf32>
    %c1 = arith.constant 1 : index
    %c0_5 = arith.constant 0 : index
    %c0_6 = arith.constant 0 : index
    %5 = vector.load %arg3[%c1, %c0_5, %c0_6] : memref<9x8x4xf32, #tpu.memory_space<vmem>>, vector<1x8x4xf32>
    %6 = vector.shape_cast %5 : vector<1x8x4xf32> to vector<8x4xf32>
    %c0_7 = arith.constant 0 : index
    %c0_8 = arith.constant 0 : index
    %c1_9 = arith.constant 1 : index
    %7 = vector.load %arg2[%c0_7, %c0_8, %c1_9] : memref<1x4x102xf32, #tpu.memory_space<vmem>>, vector<1x4x80xf32>
    %8 = vector.shape_cast %7 : vector<1x4x80xf32> to vector<4x80xf32>
    %cst_10 = arith.constant dense<0.000000e+00> : vector<8x80xf32>
    %9 = tpu.matmul %6, %8, %cst_10 {dimension_numbers = #tpu.dot_dimension_numbers<[1], [0], [0], [1], [0, 0, 1, 1], [], []>} : vector<8x4xf32>, vector<4x80xf32>, vector<8x80xf32> -> vector<8x80xf32>
    %10 = arith.addf %4, %9 : vector<8x80xf32>
    %c2 = arith.constant 2 : index
    %c0_11 = arith.constant 0 : index
    %c0_12 = arith.constant 0 : index
    %11 = vector.load %arg3[%c2, %c0_11, %c0_12] : memref<9x8x4xf32, #tpu.memory_space<vmem>>, vector<1x8x4xf32>
    %12 = vector.shape_cast %11 : vector<1x8x4xf32> to vector<8x4xf32>
    %c0_13 = arith.constant 0 : index
    %c0_14 = arith.constant 0 : index
    %c2_15 = arith.constant 2 : index
    %13 = vector.load %arg2[%c0_13, %c0_14, %c2_15] : memref<1x4x102xf32, #tpu.memory_space<vmem>>, vector<1x4x80xf32>
    %14 = vector.shape_cast %13 : vector<1x4x80xf32> to vector<4x80xf32>
    %cst_16 = arith.constant dense<0.000000e+00> : vector<8x80xf32>
    %15 = tpu.matmul %12, %14, %cst_16 {dimension_numbers = #tpu.dot_dimension_numbers<[1], [0], [0], [1], [0, 0, 1, 1], [], []>} : vector<8x4xf32>, vector<4x80xf32>, vector<8x80xf32> -> vector<8x80xf32>
    %16 = arith.addf %10, %15 : vector<8x80xf32>
    %c3 = arith.constant 3 : index
    %c0_17 = arith.constant 0 : index
    %c0_18 = arith.constant 0 : index
    %17 = vector.load %arg3[%c3, %c0_17, %c0_18] : memref<9x8x4xf32, #tpu.memory_space<vmem>>, vector<1x8x4xf32>
    %18 = vector.shape_cast %17 : vector<1x8x4xf32> to vector<8x4xf32>
    %c0_19 = arith.constant 0 : index
    %c0_20 = arith.constant 0 : index
    %c10 = arith.constant 10 : index
    %19 = vector.load %arg2[%c0_19, %c0_20, %c10] : memref<1x4x102xf32, #tpu.memory_space<vmem>>, vector<1x4x80xf32>
    %20 = vector.shape_cast %19 : vector<1x4x80xf32> to vector<4x80xf32>
    %cst_21 = arith.constant dense<0.000000e+00> : vector<8x80xf32>
    %21 = tpu.matmul %18, %20, %cst_21 {dimension_numbers = #tpu.dot_dimension_numbers<[1], [0], [0], [1], [0, 0, 1, 1], [], []>} : vector<8x4xf32>, vector<4x80xf32>, vector<8x80xf32> -> vector<8x80xf32>
    %22 = arith.addf %16, %21 : vector<8x80xf32>
    %c4 = arith.constant 4 : index
    %c0_22 = arith.constant 0 : index
    %c0_23 = arith.constant 0 : index
    %23 = vector.load %arg3[%c4, %c0_22, %c0_23] : memref<9x8x4xf32, #tpu.memory_space<vmem>>, vector<1x8x4xf32>
    %24 = vector.shape_cast %23 : vector<1x8x4xf32> to vector<8x4xf32>
    %c0_24 = arith.constant 0 : index
    %c0_25 = arith.constant 0 : index
    %c11 = arith.constant 11 : index
    %25 = vector.load %arg2[%c0_24, %c0_25, %c11] : memref<1x4x102xf32, #tpu.memory_space<vmem>>, vector<1x4x80xf32>
    %26 = vector.shape_cast %25 : vector<1x4x80xf32> to vector<4x80xf32>
    %cst_26 = arith.constant dense<0.000000e+00> : vector<8x80xf32>
    %27 = tpu.matmul %24, %26, %cst_26 {dimension_numbers = #tpu.dot_dimension_numbers<[1], [0], [0], [1], [0, 0, 1, 1], [], []>} : vector<8x4xf32>, vector<4x80xf32>, vector<8x80xf32> -> vector<8x80xf32>
    %28 = arith.addf %22, %27 : vector<8x80xf32>
    %c5 = arith.constant 5 : index
    %c0_27 = arith.constant 0 : index
    %c0_28 = arith.constant 0 : index
    %29 = vector.load %arg3[%c5, %c0_27, %c0_28] : memref<9x8x4xf32, #tpu.memory_space<vmem>>, vector<1x8x4xf32>
    %30 = vector.shape_cast %29 : vector<1x8x4xf32> to vector<8x4xf32>
    %c0_29 = arith.constant 0 : index
    %c0_30 = arith.constant 0 : index
    %c12 = arith.constant 12 : index
    %31 = vector.load %arg2[%c0_29, %c0_30, %c12] : memref<1x4x102xf32, #tpu.memory_space<vmem>>, vector<1x4x80xf32>
    %32 = vector.shape_cast %31 : vector<1x4x80xf32> to vector<4x80xf32>
    %cst_31 = arith.constant dense<0.000000e+00> : vector<8x80xf32>
    %33 = tpu.matmul %30, %32, %cst_31 {dimension_numbers = #tpu.dot_dimension_numbers<[1], [0], [0], [1], [0, 0, 1, 1], [], []>} : vector<8x4xf32>, vector<4x80xf32>, vector<8x80xf32> -> vector<8x80xf32>
    %34 = arith.addf %28, %33 : vector<8x80xf32>
    %c6 = arith.constant 6 : index
    %c0_32 = arith.constant 0 : index
    %c0_33 = arith.constant 0 : index
    %35 = vector.load %arg3[%c6, %c0_32, %c0_33] : memref<9x8x4xf32, #tpu.memory_space<vmem>>, vector<1x8x4xf32>
    %36 = vector.shape_cast %35 : vector<1x8x4xf32> to vector<8x4xf32>
    %c0_34 = arith.constant 0 : index
    %c0_35 = arith.constant 0 : index
    %c20 = arith.constant 20 : index
    %37 = vector.load %arg2[%c0_34, %c0_35, %c20] : memref<1x4x102xf32, #tpu.memory_space<vmem>>, vector<1x4x80xf32>
    %38 = vector.shape_cast %37 : vector<1x4x80xf32> to vector<4x80xf32>
    %cst_36 = arith.constant dense<0.000000e+00> : vector<8x80xf32>
    %39 = tpu.matmul %36, %38, %cst_36 {dimension_numbers = #tpu.dot_dimension_numbers<[1], [0], [0], [1], [0, 0, 1, 1], [], []>} : vector<8x4xf32>, vector<4x80xf32>, vector<8x80xf32> -> vector<8x80xf32>
    %40 = arith.addf %34, %39 : vector<8x80xf32>
    %c7 = arith.constant 7 : index
    %c0_37 = arith.constant 0 : index
    %c0_38 = arith.constant 0 : index
    %41 = vector.load %arg3[%c7, %c0_37, %c0_38] : memref<9x8x4xf32, #tpu.memory_space<vmem>>, vector<1x8x4xf32>
    %42 = vector.shape_cast %41 : vector<1x8x4xf32> to vector<8x4xf32>
    %c0_39 = arith.constant 0 : index
    %c0_40 = arith.constant 0 : index
    %c21 = arith.constant 21 : index
    %43 = vector.load %arg2[%c0_39, %c0_40, %c21] : memref<1x4x102xf32, #tpu.memory_space<vmem>>, vector<1x4x80xf32>
    %44 = vector.shape_cast %43 : vector<1x4x80xf32> to vector<4x80xf32>
    %cst_41 = arith.constant dense<0.000000e+00> : vector<8x80xf32>
    %45 = tpu.matmul %42, %44, %cst_41 {dimension_numbers = #tpu.dot_dimension_numbers<[1], [0], [0], [1], [0, 0, 1, 1], [], []>} : vector<8x4xf32>, vector<4x80xf32>, vector<8x80xf32> -> vector<8x80xf32>
    %46 = arith.addf %40, %45 : vector<8x80xf32>
    %c8 = arith.constant 8 : index
    %c0_42 = arith.constant 0 : index
    %c0_43 = arith.constant 0 : index
    %47 = vector.load %arg3[%c8, %c0_42, %c0_43] : memref<9x8x4xf32, #tpu.memory_space<vmem>>, vector<1x8x4xf32>
    %48 = vector.shape_cast %47 : vector<1x8x4xf32> to vector<8x4xf32>
    %c0_44 = arith.constant 0 : index
    %c0_45 = arith.constant 0 : index
    %c22 = arith.constant 22 : index
    %49 = vector.load %arg2[%c0_44, %c0_45, %c22] : memref<1x4x102xf32, #tpu.memory_space<vmem>>, vector<1x4x80xf32>
    %50 = vector.shape_cast %49 : vector<1x4x80xf32> to vector<4x80xf32>
    %cst_46 = arith.constant dense<0.000000e+00> : vector<8x80xf32>
    %51 = tpu.matmul %48, %50, %cst_46 {dimension_numbers = #tpu.dot_dimension_numbers<[1], [0], [0], [1], [0, 0, 1, 1], [], []>} : vector<8x4xf32>, vector<4x80xf32>, vector<8x80xf32> -> vector<8x80xf32>
    %52 = arith.addf %46, %51 : vector<8x80xf32>
    %c0_47 = arith.constant 0 : index
    %c0_48 = arith.constant 0 : index
    %53 = vector.load %arg4[%c0_47, %c0_48] : memref<8x1xf32, #tpu.memory_space<vmem>>, vector<8x1xf32>
    %54 = vector.broadcast %53 : vector<8x1xf32> to vector<8x80xf32>
    %55 = arith.addf %52, %54 : vector<8x80xf32>
    %c0_49 = arith.constant 0 : index
    %c0_50 = arith.constant 0 : index
    %c0_51 = arith.constant 0 : index
    %56 = vector.load %arg5[%c0_49, %c0_50, %c0_51] : memref<1x8x80xf32, #tpu.memory_space<vmem>>, vector<1x8x80xf32>
    %57 = vector.shape_cast %56 : vector<1x8x80xf32> to vector<8x80xf32>
    %58 = vector.shape_cast %55 : vector<8x80xf32> to vector<1x8x80xf32>
    tpu.vector_store %arg5[%c0_49, %c0_50, %c0_51], %58 {strides = array<i32>} : memref<1x8x80xf32, #tpu.memory_space<vmem>>, vector<1x8x80xf32>,
    return
  }
  func.func @transform_0(%arg0: i32, %arg1: i32) -> (i32, i32, i32) {
    %c0_i32 = arith.constant 0 : i32
    %c0_i32_0 = arith.constant 0 : i32
    %c0_i32_1 = arith.constant 0 : i32
    return %arg0, %c0_i32, %c0_i32_0 : i32, i32, i32
  }
  func.func @transform_1(%arg0: i32, %arg1: i32) -> (i32, i32, i32) {
    %c0_i32 = arith.constant 0 : i32
    %c0_i32_0 = arith.constant 0 : i32
    %c0_i32_1 = arith.constant 0 : i32
    return %c0_i32, %arg1, %c0_i32_0 : i32, i32, i32
  }
  func.func @transform_2(%arg0: i32, %arg1: i32) -> (i32, i32) {
    %c0_i32 = arith.constant 0 : i32
    %c0_i32_0 = arith.constant 0 : i32
    return %arg1, %c0_i32 : i32, i32
  }
  func.func @transform_3(%arg0: i32, %arg1: i32) -> (i32, i32, i32) {
    %c0_i32 = arith.constant 0 : i32
    %c0_i32_0 = arith.constant 0 : i32
    return %arg0, %arg1, %c0_i32 : i32, i32, i32
  }
}

module attributes {stable_mosaic.version = 11 : i64} {
  func.func @_gemm_bias_kernel_1k(%arg0: i32, %arg1: i32, %arg2: memref<8x36xf32, #tpu.memory_space<vmem>>, %arg3: memref<36x512xf32, #tpu.memory_space<vmem>>, %arg4: memref<8x1xf32, #tpu.memory_space<vmem>>, %arg5: memref<8x512xf32, #tpu.memory_space<vmem>>) attributes {dimension_semantics = [#tpu.dimension_semantics<parallel>, #tpu.dimension_semantics<parallel>], iteration_bounds = array<i64: 1, 1>, scalar_prefetch = 0 : i64, scratch_operands = 0 : i64, tpu.core_type = #tpu.core_type<tc>, window_params = [{transform_indices = @transform_0, window_bounds = array<i64: 8, 36>}, {transform_indices = @transform_1, window_bounds = array<i64: 36, 512>}, {transform_indices = @transform_2, window_bounds = array<i64: 8, 1>}, {transform_indices = @transform_3, window_bounds = array<i64: 8, 512>}]} {
    %c0 = arith.constant 0 : index
    %c0_0 = arith.constant 0 : index
    %0 = vector.load %arg2[%c0, %c0_0] : memref<8x36xf32, #tpu.memory_space<vmem>>, vector<8x36xf32>
    %c0_1 = arith.constant 0 : index
    %c0_2 = arith.constant 0 : index
    %1 = vector.load %arg3[%c0_1, %c0_2] : memref<36x512xf32, #tpu.memory_space<vmem>>, vector<36x512xf32>
    %cst = arith.constant dense<0.000000e+00> : vector<8x512xf32>
    %2 = tpu.matmul %0, %1, %cst {dimension_numbers = #tpu.dot_dimension_numbers<[1], [0], [0], [1], [0, 0, 1, 1], [], []>} : vector<8x36xf32>, vector<36x512xf32>, vector<8x512xf32> -> vector<8x512xf32>
    %c0_3 = arith.constant 0 : index
    %c0_4 = arith.constant 0 : index
    %3 = vector.load %arg4[%c0_3, %c0_4] : memref<8x1xf32, #tpu.memory_space<vmem>>, vector<8x1xf32>
    %4 = vector.broadcast %3 : vector<8x1xf32> to vector<8x512xf32>
    %5 = arith.addf %2, %4 : vector<8x512xf32>
    %c0_5 = arith.constant 0 : index
    %c0_6 = arith.constant 0 : index
    %6 = vector.load %arg5[%c0_5, %c0_6] : memref<8x512xf32, #tpu.memory_space<vmem>>, vector<8x512xf32>
    tpu.vector_store %arg5[%c0_5, %c0_6], %5 {strides = array<i32>} : memref<8x512xf32, #tpu.memory_space<vmem>>, vector<8x512xf32>,
    return
  }
  func.func @transform_0(%arg0: i32, %arg1: i32) -> (i32, i32) {
    %c0_i32 = arith.constant 0 : i32
    %c0_i32_0 = arith.constant 0 : i32
    return %arg0, %c0_i32 : i32, i32
  }
  func.func @transform_1(%arg0: i32, %arg1: i32) -> (i32, i32) {
    %c0_i32 = arith.constant 0 : i32
    %c0_i32_0 = arith.constant 0 : i32
    return %c0_i32, %arg1 : i32, i32
  }
  func.func @transform_2(%arg0: i32, %arg1: i32) -> (i32, i32) {
    %c0_i32 = arith.constant 0 : i32
    %c0_i32_0 = arith.constant 0 : i32
    return %arg0, %c0_i32 : i32, i32
  }
  func.func @transform_3(%arg0: i32, %arg1: i32) -> (i32, i32) {
    %c0_i32 = arith.constant 0 : i32
    return %arg0, %arg1 : i32, i32
  }
}

module attributes {stable_mosaic.version = 11 : i64} {
  func.func @_gemm_bias_kernel_1k(%arg0: i32, %arg1: i32, %arg2: memref<16x72xf32, #tpu.memory_space<vmem>>, %arg3: memref<72x512xf32, #tpu.memory_space<vmem>>, %arg4: memref<16x1xf32, #tpu.memory_space<vmem>>, %arg5: memref<16x512xf32, #tpu.memory_space<vmem>>) attributes {dimension_semantics = [#tpu.dimension_semantics<parallel>, #tpu.dimension_semantics<parallel>], iteration_bounds = array<i64: 1, 1>, scalar_prefetch = 0 : i64, scratch_operands = 0 : i64, tpu.core_type = #tpu.core_type<tc>, window_params = [{transform_indices = @transform_0, window_bounds = array<i64: 16, 72>}, {transform_indices = @transform_1, window_bounds = array<i64: 72, 512>}, {transform_indices = @transform_2, window_bounds = array<i64: 16, 1>}, {transform_indices = @transform_3, window_bounds = array<i64: 16, 512>}]} {
    %c0 = arith.constant 0 : index
    %c0_0 = arith.constant 0 : index
    %0 = vector.load %arg2[%c0, %c0_0] : memref<16x72xf32, #tpu.memory_space<vmem>>, vector<16x72xf32>
    %c0_1 = arith.constant 0 : index
    %c0_2 = arith.constant 0 : index
    %1 = vector.load %arg3[%c0_1, %c0_2] : memref<72x512xf32, #tpu.memory_space<vmem>>, vector<72x512xf32>
    %cst = arith.constant dense<0.000000e+00> : vector<16x512xf32>
    %2 = tpu.matmul %0, %1, %cst {dimension_numbers = #tpu.dot_dimension_numbers<[1], [0], [0], [1], [0, 0, 1, 1], [], []>} : vector<16x72xf32>, vector<72x512xf32>, vector<16x512xf32> -> vector<16x512xf32>
    %c0_3 = arith.constant 0 : index
    %c0_4 = arith.constant 0 : index
    %3 = vector.load %arg4[%c0_3, %c0_4] : memref<16x1xf32, #tpu.memory_space<vmem>>, vector<16x1xf32>
    %4 = vector.broadcast %3 : vector<16x1xf32> to vector<16x512xf32>
    %5 = arith.addf %2, %4 : vector<16x512xf32>
    %c0_5 = arith.constant 0 : index
    %c0_6 = arith.constant 0 : index
    %6 = vector.load %arg5[%c0_5, %c0_6] : memref<16x512xf32, #tpu.memory_space<vmem>>, vector<16x512xf32>
    tpu.vector_store %arg5[%c0_5, %c0_6], %5 {strides = array<i32>} : memref<16x512xf32, #tpu.memory_space<vmem>>, vector<16x512xf32>,
    return
  }
  func.func @transform_0(%arg0: i32, %arg1: i32) -> (i32, i32) {
    %c0_i32 = arith.constant 0 : i32
    %c0_i32_0 = arith.constant 0 : i32
    return %arg0, %c0_i32 : i32, i32
  }
  func.func @transform_1(%arg0: i32, %arg1: i32) -> (i32, i32) {
    %c0_i32 = arith.constant 0 : i32
    %c0_i32_0 = arith.constant 0 : i32
    return %c0_i32, %arg1 : i32, i32
  }
  func.func @transform_2(%arg0: i32, %arg1: i32) -> (i32, i32) {
    %c0_i32 = arith.constant 0 : i32
    %c0_i32_0 = arith.constant 0 : i32
    return %arg0, %c0_i32 : i32, i32
  }
  func.func @transform_3(%arg0: i32, %arg1: i32) -> (i32, i32) {
    %c0_i32 = arith.constant 0 : i32
    return %arg0, %arg1 : i32, i32
  }
}

module attributes {stable_mosaic.version = 11 : i64} {
  func.func @_gap_kernel(%arg0: i32, %arg1: memref<32x256xf32, #tpu.memory_space<vmem>>, %arg2: memref<32x1xf32, #tpu.memory_space<vmem>>) attributes {dimension_semantics = [#tpu.dimension_semantics<parallel>], iteration_bounds = array<i64: 1>, scalar_prefetch = 0 : i64, scratch_operands = 0 : i64, tpu.core_type = #tpu.core_type<tc>, window_params = [{transform_indices = @transform_0, window_bounds = array<i64: 32, 256>}, {transform_indices = @transform_1, window_bounds = array<i64: 32, 1>}]} {
    %c0 = arith.constant 0 : index
    %c0_0 = arith.constant 0 : index
    %0 = vector.load %arg1[%c0, %c0_0] : memref<32x256xf32, #tpu.memory_space<vmem>>, vector<32x256xf32>
    %cst = arith.constant dense<0.000000e+00> : vector<32xf32>
    %1 = vector.multi_reduction <add>, %0, %cst [1] : vector<32x256xf32> to vector<32xf32>
    %2 = vector.shape_cast %1 : vector<32xf32> to vector<32x1xf32>
    %cst_1 = arith.constant 3.906250e-03 : f32
    %3 = vector.broadcast %cst_1 : f32 to vector<32x1xf32>
    %4 = arith.mulf %2, %3 : vector<32x1xf32>
    %c0_2 = arith.constant 0 : index
    %c0_3 = arith.constant 0 : index
    %5 = vector.load %arg2[%c0_2, %c0_3] : memref<32x1xf32, #tpu.memory_space<vmem>>, vector<32x1xf32>
    tpu.vector_store %arg2[%c0_2, %c0_3], %4 {strides = array<i32>} : memref<32x1xf32, #tpu.memory_space<vmem>>, vector<32x1xf32>,
    return
  }
  func.func @transform_0(%arg0: i32) -> (i32, i32) {
    %c0_i32 = arith.constant 0 : i32
    %c0_i32_0 = arith.constant 0 : i32
    return %arg0, %c0_i32 : i32, i32
  }
  func.func @transform_1(%arg0: i32) -> (i32, i32) {
    %c0_i32 = arith.constant 0 : i32
    %c0_i32_0 = arith.constant 0 : i32
    return %arg0, %c0_i32 : i32, i32
  }
}

</mosaic_0001>

<llo_original>
// kernel: tpu_custom_call.1
$region0: #{tpu_custom_call.1}
  #allocation0 [shape = 'u32[]', space=smem, size = 0x4, offset = 0x4, fixed_abs, tag = 'smem constant byte address 0x4 - core index']
  #allocation1 [shape = 'u32[144,128]{1,0:T(1,128)}', space=vmem, size = 0x12000, scoped, tag = 'internal scratch']
  %s0 = inlined_call_operand.vmem [shape: f32[1,4,102], index: 0, kind: input, shape index: {}]
  %s1 = inlined_call_operand.vmem [shape: f32[9,8,4], index: 1, kind: input, shape index: {}]
  %s2 = inlined_call_operand.vmem [shape: f32[8,1], index: 2, kind: input, shape index: {}]
  %s3 = inlined_call_operand.hbm [shape: f32[1,8,80], index: 3, kind: output, shape index: {}]
  %s4 = sld [smem:[#allocation0]]
  $region22: #{tpu_custom_call.1} parent=0
    _
  %s6 = ssub.s32 1, %s4
  %s7 = scalar_select 0, %s6, %s4
  $region1: #{tpu_custom_call.1} parent=0
    #allocation2 [shape = 'u8[4096]{0}', space=vmem, size = 0x1000, scoped, tag = 'output window, operand 0, single buffered']
    #allocation3 [shape = 's32[1]{0}', space=sflag, size = 0x4, scoped, tag = 'scoped memory for tpu_custom_call.1']
    %8 = vsyncpa [#allocation3], 0
    // Predicated region
    $region2: #{tpu_custom_call.1} parent=1 // pred_check
      _
    $region3: #{tpu_custom_call.1} parent=1 // pred_check_branch
      %10 = sbr.rel (0) target = $region5
    $region4: #{tpu_custom_call.1} parent=1 // pred_region
      _
    $region5: #{tpu_custom_call.1} parent=1 // pred_fallthru
      _
    // Predicated region
    $region6: #{tpu_custom_call.1} parent=1 // pred_check
      _
    $region7: #{tpu_custom_call.1} parent=1 // pred_check_branch
      %12 = sbr.rel (0) target = $region9
    $region8: #{tpu_custom_call.1} parent=1 // pred_region
      _
    $region9: #{tpu_custom_call.1} parent=1 // pred_fallthru
      _
    // Predicated region
    $region10: #{tpu_custom_call.1} parent=1 // pred_check
      _
    $region11: #{tpu_custom_call.1} parent=1 // pred_check_branch
      %14 = sbr.rel (0) target = $region13
    $region12: #{tpu_custom_call.1} parent=1 // pred_region
      _
    $region13: #{tpu_custom_call.1} parent=1 // pred_fallthru
      _
    %v15 = vld [vmem:[%s1] sm:$0xff]
    %v16 = vld [vmem:[%s0] sm:$0xf]
    %s17 = scalar_lea.vmem %s1, 8
    %v18 = vld [vmem:[%s17] sm:$0xff]
    %20 = vrot.lane.b32.xlu0 %v16, 127
    %v21 = vpop.permute.xlu0 %20
    %vm22 = vcmask 31744
    %v24 = vsel %vm22, %v18, 0
    %vm26 = vcmask 1043456
    %v27 = vsel %vm26, %v21, 0
    %29 = vmatprep.subr.mxu0 0.0
    %30 = vmatpush1.msra.mxu0 %v27
    %31 = vmatprep.subr.mxu0 0.0
    %32 = vmatpush1.msra.mxu0 0.0
    %33 = vmatprep.subr.mxu0 0.0
    %34 = vmatpush1.msra.mxu0 0.0
    %35 = vmatprep.subr.mxu0 0.0
    %36 = vmatpush1.msra.mxu0 0.0
    %37 = vmatprep.subr.mxu0 0.0
    %38 = vmatpush1.msra.mxu0 0.0
    %39 = vmatprep.subr.mxu0 0.0
    %40 = vmatpush1.msra.mxu0 0.0
    %41 = vmatprep.subr.mxu0 0.0
    %42 = vmatpush1.msra.mxu0 0.0
    %43 = vmatprep.subr.mxu0 0.0
    %44 = vmatpush1.msra.mxu0 0.0
    %45 = vmatprep.subr.mxu0 0.0
    %46 = vmatpush1.msra.mxu0 0.0
    %47 = vmatprep.subr.mxu0 0.0
    %48 = vmatpush1.msra.mxu0 0.0
    %49 = vmatprep.subr.mxu0 0.0
    %50 = vmatpush1.msra.mxu0 0.0
    %51 = vmatprep.subr.mxu0 0.0
    %52 = vmatpush1.msra.mxu0 0.0
    %53 = vmatprep.subr.mxu0 0.0
    %54 = vmatpush1.msra.mxu0 0.0
    %55 = vmatprep.subr.mxu0 0.0
    %56 = vmatpush1.msra.mxu0 0.0
    %57 = vmatprep.subr.mxu0 0.0
    %58 = vmatpush1.msra.mxu0 0.0
    %59 = vmatprep.subr.mxu0 0.0
    %60 = vmatpush1.msra.mxu0 0.0
    %61 = vmatprep.subr.mxu0 0.0
    %62 = vmatpush1.msra.mxu0 0.0
    %63 = vmatprep.subr.mxu0 0.0
    %64 = vmatpush1.msra.mxu0 0.0
    %65 = vmatprep.subr.mxu0 0.0
    %66 = vmatpush1.msra.mxu0 0.0
    %67 = vmatprep.subr.mxu0 0.0
    %68 = vmatpush1.msra.mxu0 0.0
    %69 = vmatprep.subr.mxu0 0.0
    %70 = vmatpush1.msra.mxu0 0.0
    %71 = vmatprep.subr.mxu0 0.0
    %72 = vmatpush1.msra.mxu0 0.0
    %73 = vmatprep.subr.mxu0 0.0
    %74 = vmatpush1.msra.mxu0 0.0
    %75 = vmatprep.subr.mxu0 0.0
    %76 = vmatpush1.msra.mxu0 0.0
    %77 = vmatprep.subr.mxu0 0.0
    %78 = vmatpush1.msra.mxu0 0.0
    %79 = vmatprep.subr.mxu0 0.0
    %80 = vmatpush1.msra.mxu0 0.0
    %81 = vmatprep.subr.mxu0 0.0
    %82 = vmatpush1.msra.mxu0 0.0
    %83 = vmatprep.subr.mxu0 0.0
    %84 = vmatpush1.msra.mxu0 0.0
    %85 = vmatprep.subr.mxu0 0.0
    %86 = vmatpush1.msra.mxu0 0.0
    %87 = vmatprep.subr.mxu0 0.0
    %88 = vmatpush1.msra.mxu0 0.0
    %89 = vmatprep.subr.mxu0 0.0
    %90 = vmatpush1.msra.mxu0 0.0
    %91 = vmatprep.subr.mxu0 0.0
    %92 = vmatpush1.msra.mxu0 0.0
    %93 = vmatprep.mubr.f32.mxu0 0.0
    %94 = vmatmul.mubr.f32.gmra.mrb[0].mxu0 %v24
    %v95 = vpop.f32.mrb[0].mxu0
    %v96 = vadd.f32 0.0, %v95
    %v97 = vpop.f32.mrb[0].mxu0
    %98 = vdwg.mxu0
    %v100 = vsel %vm22, %v15, 0
    %v102 = vsel %vm26, %v16, 0
    %104 = vmatprep.subr.mxu0 0.0
    %105 = vmatpush1.msra.mxu0 %v102
    %106 = vmatprep.subr.mxu0 0.0
    %107 = vmatpush1.msra.mxu0 0.0
    %108 = vmatprep.subr.mxu0 0.0
    %109 = vmatpush1.msra.mxu0 0.0
    %110 = vmatprep.subr.mxu0 0.0
    %111 = vmatpush1.msra.mxu0 0.0
    %112 = vmatprep.subr.mxu0 0.0
    %113 = vmatpush1.msra.mxu0 0.0
    %114 = vmatprep.subr.mxu0 0.0
    %115 = vmatpush1.msra.mxu0 0.0
    %116 = vmatprep.subr.mxu0 0.0
    %117 = vmatpush1.msra.mxu0 0.0
    %118 = vmatprep.subr.mxu0 0.0
    %119 = vmatpush1.msra.mxu0 0.0
    %120 = vmatprep.subr.mxu0 0.0
    %121 = vmatpush1.msra.mxu0 0.0
    %122 = vmatprep.subr.mxu0 0.0
    %123 = vmatpush1.msra.mxu0 0.0
    %124 = vmatprep.subr.mxu0 0.0
    %125 = vmatpush1.msra.mxu0 0.0
    %126 = vmatprep.subr.mxu0 0.0
    %127 = vmatpush1.msra.mxu0 0.0
    %128 = vmatprep.subr.mxu0 0.0
    %129 = vmatpush1.msra.mxu0 0.0
    %130 = vmatprep.subr.mxu0 0.0
    %131 = vmatpush1.msra.mxu0 0.0
    %132 = vmatprep.subr.mxu0 0.0
    %133 = vmatpush1.msra.mxu0 0.0
    %134 = vmatprep.subr.mxu0 0.0
    %135 = vmatpush1.msra.mxu0 0.0
    %136 = vmatprep.subr.mxu0 0.0
    %137 = vmatpush1.msra.mxu0 0.0
    %138 = vmatprep.subr.mxu0 0.0
    %139 = vmatpush1.msra.mxu0 0.0
    %140 = vmatprep.subr.mxu0 0.0
    %141 = vmatpush1.msra.mxu0 0.0
    %142 = vmatprep.subr.mxu0 0.0
    %143 = vmatpush1.msra.mxu0 0.0
    %144 = vmatprep.subr.mxu0 0.0
    %145 = vmatpush1.msra.mxu0 0.0
    %146 = vmatprep.subr.mxu0 0.0
    %147 = vmatpush1.msra.mxu0 0.0
    %148 = vmatprep.subr.mxu0 0.0
    %149 = vmatpush1.msra.mxu0 0.0
    %150 = vmatprep.subr.mxu0 0.0
    %151 = vmatpush1.msra.mxu0 0.0
    %152 = vmatprep.subr.mxu0 0.0
    %153 = vmatpush1.msra.mxu0 0.0
    %154 = vmatprep.subr.mxu0 0.0
    %155 = vmatpush1.msra.mxu0 0.0
    %156 = vmatprep.subr.mxu0 0.0
    %157 = vmatpush1.msra.mxu0 0.0
    %158 = vmatprep.subr.mxu0 0.0
    %159 = vmatpush1.msra.mxu0 0.0
    %160 = vmatprep.subr.mxu0 0.0
    %161 = vmatpush1.msra.mxu0 0.0
    %162 = vmatprep.subr.mxu0 0.0
    %163 = vmatpush1.msra.mxu0 0.0
    %164 = vmatprep.subr.mxu0 0.0
    %165 = vmatpush1.msra.mxu0 0.0
    %166 = vmatprep.subr.mxu0 0.0
    %167 = vmatpush1.msra.mxu0 0.0
    %168 = vmatprep.mubr.f32.mxu0 0.0
    %169 = vmatmul.mubr.f32.gmra.mrb[0].mxu0 %v100
    %v170 = vpop.f32.mrb[0].mxu0
    %v171 = vadd.f32 %v96, %v170
    %v172 = vpop.f32.mrb[0].mxu0
    %173 = vdwg.mxu0
    %s174 = scalar_lea.vmem %s1, 16
    %v175 = vld [vmem:[%s174] sm:$0xff]
    %176 = vrot.lane.b32.xlu0 %v16, 126
    %v177 = vpop.permute.xlu0 %176
    %v179 = vsel %vm22, %v175, 0
    %v181 = vsel %vm26, %v177, 0
    %183 = vmatprep.subr.mxu0 0.0
    %184 = vmatpush1.msra.mxu0 %v181
    %185 = vmatprep.subr.mxu0 0.0
    %186 = vmatpush1.msra.mxu0 0.0
    %187 = vmatprep.subr.mxu0 0.0
    %188 = vmatpush1.msra.mxu0 0.0
    %189 = vmatprep.subr.mxu0 0.0
    %190 = vmatpush1.msra.mxu0 0.0
    %191 = vmatprep.subr.mxu0 0.0
    %192 = vmatpush1.msra.mxu0 0.0
    %193 = vmatprep.subr.mxu0 0.0
    %194 = vmatpush1.msra.mxu0 0.0
    %195 = vmatprep.subr.mxu0 0.0
    %196 = vmatpush1.msra.mxu0 0.0
    %197 = vmatprep.subr.mxu0 0.0
    %198 = vmatpush1.msra.mxu0 0.0
    %199 = vmatprep.subr.mxu0 0.0
    %200 = vmatpush1.msra.mxu0 0.0
    %201 = vmatprep.subr.mxu0 0.0
    %202 = vmatpush1.msra.mxu0 0.0
    %203 = vmatprep.subr.mxu0 0.0
    %204 = vmatpush1.msra.mxu0 0.0
    %205 = vmatprep.subr.mxu0 0.0
    %206 = vmatpush1.msra.mxu0 0.0
    %207 = vmatprep.subr.mxu0 0.0
    %208 = vmatpush1.msra.mxu0 0.0
    %209 = vmatprep.subr.mxu0 0.0
    %210 = vmatpush1.msra.mxu0 0.0
    %211 = vmatprep.subr.mxu0 0.0
    %212 = vmatpush1.msra.mxu0 0.0
    %213 = vmatprep.subr.mxu0 0.0
    %214 = vmatpush1.msra.mxu0 0.0
    %215 = vmatprep.subr.mxu0 0.0
    %216 = vmatpush1.msra.mxu0 0.0
    %217 = vmatprep.subr.mxu0 0.0
    %218 = vmatpush1.msra.mxu0 0.0
    %219 = vmatprep.subr.mxu0 0.0
    %220 = vmatpush1.msra.mxu0 0.0
    %221 = vmatprep.subr.mxu0 0.0
    %222 = vmatpush1.msra.mxu0 0.0
    %223 = vmatprep.subr.mxu0 0.0
    %224 = vmatpush1.msra.mxu0 0.0
    %225 = vmatprep.subr.mxu0 0.0
    %226 = vmatpush1.msra.mxu0 0.0
    %227 = vmatprep.subr.mxu0 0.0
    %228 = vmatpush1.msra.mxu0 0.0
    %229 = vmatprep.subr.mxu0 0.0
    %230 = vmatpush1.msra.mxu0 0.0
    %231 = vmatprep.subr.mxu0 0.0
    %232 = vmatpush1.msra.mxu0 0.0
    %233 = vmatprep.subr.mxu0 0.0
    %234 = vmatpush1.msra.mxu0 0.0
    %235 = vmatprep.subr.mxu0 0.0
    %236 = vmatpush1.msra.mxu0 0.0
    %237 = vmatprep.subr.mxu0 0.0
    %238 = vmatpush1.msra.mxu0 0.0
    %239 = vmatprep.subr.mxu0 0.0
    %240 = vmatpush1.msra.mxu0 0.0
    %241 = vmatprep.subr.mxu0 0.0
    %242 = vmatpush1.msra.mxu0 0.0
    %243 = vmatprep.subr.mxu0 0.0
    %244 = vmatpush1.msra.mxu0 0.0
    %245 = vmatprep.subr.mxu0 0.0
    %246 = vmatpush1.msra.mxu0 0.0
    %247 = vmatprep.mubr.f32.mxu0 0.0
    %248 = vmatmul.mubr.f32.gmra.mrb[0].mxu0 %v179
    %v249 = vpop.f32.mrb[0].mxu0
    %v250 = vadd.f32 0.0, %v249
    %v251 = vpop.f32.mrb[0].mxu0
    %252 = vdwg.mxu0
    %v253 = vadd.f32 %v171, %v250
    %s254 = scalar_lea.vmem %s1, 24
    %v255 = vld [vmem:[%s254] sm:$0xff]
    %256 = vrot.lane.b32.xlu0 %v16, 118
    %v257 = vpop.permute.xlu0 %256
    %v259 = vsel %vm22, %v255, 0
    %v261 = vsel %vm26, %v257, 0
    %263 = vmatprep.subr.mxu0 0.0
    %264 = vmatpush1.msra.mxu0 %v261
    %265 = vmatprep.subr.mxu0 0.0
    %266 = vmatpush1.msra.mxu0 0.0
    %267 = vmatprep.subr.mxu0 0.0
    %268 = vmatpush1.msra.mxu0 0.0
    %269 = vmatprep.subr.mxu0 0.0
    %270 = vmatpush1.msra.mxu0 0.0
    %271 = vmatprep.subr.mxu0 0.0
    %272 = vmatpush1.msra.mxu0 0.0
    %273 = vmatprep.subr.mxu0 0.0
    %274 = vmatpush1.msra.mxu0 0.0
    %275 = vmatprep.subr.mxu0 0.0
    %276 = vmatpush1.msra.mxu0 0.0
    %277 = vmatprep.subr.mxu0 0.0
    %278 = vmatpush1.msra.mxu0 0.0
    %279 = vmatprep.subr.mxu0 0.0
    %280 = vmatpush1.msra.mxu0 0.0
    %281 = vmatprep.subr.mxu0 0.0
    %282 = vmatpush1.msra.mxu0 0.0
    %283 = vmatprep.subr.mxu0 0.0
    %284 = vmatpush1.msra.mxu0 0.0
    %285 = vmatprep.subr.mxu0 0.0
    %286 = vmatpush1.msra.mxu0 0.0
    %287 = vmatprep.subr.mxu0 0.0
    %288 = vmatpush1.msra.mxu0 0.0
    %289 = vmatprep.subr.mxu0 0.0
    %290 = vmatpush1.msra.mxu0 0.0
    %291 = vmatprep.subr.mxu0 0.0
    %292 = vmatpush1.msra.mxu0 0.0
    %293 = vmatprep.subr.mxu0 0.0
    %294 = vmatpush1.msra.mxu0 0.0
    %295 = vmatprep.subr.mxu0 0.0
    %296 = vmatpush1.msra.mxu0 0.0
    %297 = vmatprep.subr.mxu0 0.0
    %298 = vmatpush1.msra.mxu0 0.0
    %299 = vmatprep.subr.mxu0 0.0
    %300 = vmatpush1.msra.mxu0 0.0
    %301 = vmatprep.subr.mxu0 0.0
    %302 = vmatpush1.msra.mxu0 0.0
    %303 = vmatprep.subr.mxu0 0.0
    %304 = vmatpush1.msra.mxu0 0.0
    %305 = vmatprep.subr.mxu0 0.0
    %306 = vmatpush1.msra.mxu0 0.0
    %307 = vmatprep.subr.mxu0 0.0
    %308 = vmatpush1.msra.mxu0 0.0
    %309 = vmatprep.subr.mxu0 0.0
    %310 = vmatpush1.msra.mxu0 0.0
    %311 = vmatprep.subr.mxu0 0.0
    %312 = vmatpush1.msra.mxu0 0.0
    %313 = vmatprep.subr.mxu0 0.0
    %314 = vmatpush1.msra.mxu0 0.0
    %315 = vmatprep.subr.mxu0 0.0
    %316 = vmatpush1.msra.mxu0 0.0
    %317 = vmatprep.subr.mxu0 0.0
    %318 = vmatpush1.msra.mxu0 0.0
    %319 = vmatprep.subr.mxu0 0.0
    %320 = vmatpush1.msra.mxu0 0.0
    %321 = vmatprep.subr.mxu0 0.0
    %322 = vmatpush1.msra.mxu0 0.0
    %323 = vmatprep.subr.mxu0 0.0
    %324 = vmatpush1.msra.mxu0 0.0
    %325 = vmatprep.subr.mxu0 0.0
    %326 = vmatpush1.msra.mxu0 0.0
    %327 = vmatprep.mubr.f32.mxu0 0.0
    %328 = vmatmul.mubr.f32.gmra.mrb[0].mxu0 %v259
    %v329 = vpop.f32.mrb[0].mxu0
    %v330 = vadd.f32 0.0, %v329
    %v331 = vpop.f32.mrb[0].mxu0
    %332 = vdwg.mxu0
    %v333 = vadd.f32 %v253, %v330
    %s334 = scalar_lea.vmem %s1, 32
    %v335 = vld [vmem:[%s334] sm:$0xff]
    %336 = vrot.lane.b32.xlu0 %v16, 117
    %v337 = vpop.permute.xlu0 %336
    %v339 = vsel %vm22, %v335, 0
    %v341 = vsel %vm26, %v337, 0
    %343 = vmatprep.subr.mxu0 0.0
    %344 = vmatpush1.msra.mxu0 %v341
    %345 = vmatprep.subr.mxu0 0.0
    %346 = vmatpush1.msra.mxu0 0.0
    %347 = vmatprep.subr.mxu0 0.0
    %348 = vmatpush1.msra.mxu0 0.0
    %349 = vmatprep.subr.mxu0 0.0
    %350 = vmatpush1.msra.mxu0 0.0
    %351 = vmatprep.subr.mxu0 0.0
    %352 = vmatpush1.msra.mxu0 0.0
    %353 = vmatprep.subr.mxu0 0.0
    %354 = vmatpush1.msra.mxu0 0.0
    %355 = vmatprep.subr.mxu0 0.0
    %356 = vmatpush1.msra.mxu0 0.0
    %357 = vmatprep.subr.mxu0 0.0
    %358 = vmatpush1.msra.mxu0 0.0
    %359 = vmatprep.subr.mxu0 0.0
    %360 = vmatpush1.msra.mxu0 0.0
    %361 = vmatprep.subr.mxu0 0.0
    %362 = vmatpush1.msra.mxu0 0.0
    %363 = vmatprep.subr.mxu0 0.0
    %364 = vmatpush1.msra.mxu0 0.0
    %365 = vmatprep.subr.mxu0 0.0
    %366 = vmatpush1.msra.mxu0 0.0
    %367 = vmatprep.subr.mxu0 0.0
    %368 = vmatpush1.msra.mxu0 0.0
    %369 = vmatprep.subr.mxu0 0.0
    %370 = vmatpush1.msra.mxu0 0.0
    %371 = vmatprep.subr.mxu0 0.0
    %372 = vmatpush1.msra.mxu0 0.0
    %373 = vmatprep.subr.mxu0 0.0
    %374 = vmatpush1.msra.mxu0 0.0
    %375 = vmatprep.subr.mxu0 0.0
    %376 = vmatpush1.msra.mxu0 0.0
    %377 = vmatprep.subr.mxu0 0.0
    %378 = vmatpush1.msra.mxu0 0.0
    %379 = vmatprep.subr.mxu0 0.0
    %380 = vmatpush1.msra.mxu0 0.0
    %381 = vmatprep.subr.mxu0 0.0
    %382 = vmatpush1.msra.mxu0 0.0
    %383 = vmatprep.subr.mxu0 0.0
    %384 = vmatpush1.msra.mxu0 0.0
    %385 = vmatprep.subr.mxu0 0.0
    %386 = vmatpush1.msra.mxu0 0.0
    %387 = vmatprep.subr.mxu0 0.0
    %388 = vmatpush1.msra.mxu0 0.0
    %389 = vmatprep.subr.mxu0 0.0
    %390 = vmatpush1.msra.mxu0 0.0
    %391 = vmatprep.subr.mxu0 0.0
    %392 = vmatpush1.msra.mxu0 0.0
    %393 = vmatprep.subr.mxu0 0.0
    %394 = vmatpush1.msra.mxu0 0.0
    %395 = vmatprep.subr.mxu0 0.0
    %396 = vmatpush1.msra.mxu0 0.0
    %397 = vmatprep.subr.mxu0 0.0
    %398 = vmatpush1.msra.mxu0 0.0
    %399 = vmatprep.subr.mxu0 0.0
    %400 = vmatpush1.msra.mxu0 0.0
    %401 = vmatprep.subr.mxu0 0.0
    %402 = vmatpush1.msra.mxu0 0.0
    %403 = vmatprep.subr.mxu0 0.0
    %404 = vmatpush1.msra.mxu0 0.0
    %405 = vmatprep.subr.mxu0 0.0
    %406 = vmatpush1.msra.mxu0 0.0
    %407 = vmatprep.mubr.f32.mxu0 0.0
    %408 = vmatmul.mubr.f32.gmra.mrb[0].mxu0 %v339
    %v409 = vpop.f32.mrb[0].mxu0
    %v410 = vadd.f32 0.0, %v409
    %v411 = vpop.f32.mrb[0].mxu0
    %412 = vdwg.mxu0
    %v413 = vadd.f32 %v333, %v410
    %s414 = scalar_lea.vmem %s1, 40
    %v415 = vld [vmem:[%s414] sm:$0xff]
    %416 = vrot.lane.b32.xlu0 %v16, 116
    %v417 = vpop.permute.xlu0 %416
    %v419 = vsel %vm22, %v415, 0
    %v421 = vsel %vm26, %v417, 0
    %423 = vmatprep.subr.mxu0 0.0
    %424 = vmatpush1.msra.mxu0 %v421
    %425 = vmatprep.subr.mxu0 0.0
    %426 = vmatpush1.msra.mxu0 0.0
    %427 = vmatprep.subr.mxu0 0.0
    %428 = vmatpush1.msra.mxu0 0.0
    %429 = vmatprep.subr.mxu0 0.0
    %430 = vmatpush1.msra.mxu0 0.0
    %431 = vmatprep.subr.mxu0 0.0
    %432 = vmatpush1.msra.mxu0 0.0
    %433 = vmatprep.subr.mxu0 0.0
    %434 = vmatpush1.msra.mxu0 0.0
    %435 = vmatprep.subr.mxu0 0.0
    %436 = vmatpush1.msra.mxu0 0.0
    %437 = vmatprep.subr.mxu0 0.0
    %438 = vmatpush1.msra.mxu0 0.0
    %439 = vmatprep.subr.mxu0 0.0
    %440 = vmatpush1.msra.mxu0 0.0
    %441 = vmatprep.subr.mxu0 0.0
    %442 = vmatpush1.msra.mxu0 0.0
    %443 = vmatprep.subr.mxu0 0.0
    %444 = vmatpush1.msra.mxu0 0.0
    %445 = vmatprep.subr.mxu0 0.0
    %446 = vmatpush1.msra.mxu0 0.0
    %447 = vmatprep.subr.mxu0 0.0
    %448 = vmatpush1.msra.mxu0 0.0
    %449 = vmatprep.subr.mxu0 0.0
    %450 = vmatpush1.msra.mxu0 0.0
    %451 = vmatprep.subr.mxu0 0.0
    %452 = vmatpush1.msra.mxu0 0.0
    %453 = vmatprep.subr.mxu0 0.0
    %454 = vmatpush1.msra.mxu0 0.0
    %455 = vmatprep.subr.mxu0 0.0
    %456 = vmatpush1.msra.mxu0 0.0
    %457 = vmatprep.subr.mxu0 0.0
    %458 = vmatpush1.msra.mxu0 0.0
    %459 = vmatprep.subr.mxu0 0.0
    %460 = vmatpush1.msra.mxu0 0.0
    %461 = vmatprep.subr.mxu0 0.0
    %462 = vmatpush1.msra.mxu0 0.0
    %463 = vmatprep.subr.mxu0 0.0
    %464 = vmatpush1.msra.mxu0 0.0
    %465 = vmatprep.subr.mxu0 0.0
    %466 = vmatpush1.msra.mxu0 0.0
    %467 = vmatprep.subr.mxu0 0.0
    %468 = vmatpush1.msra.mxu0 0.0
    %469 = vmatprep.subr.mxu0 0.0
    %470 = vmatpush1.msra.mxu0 0.0
    %471 = vmatprep.subr.mxu0 0.0
    %472 = vmatpush1.msra.mxu0 0.0
    %473 = vmatprep.subr.mxu0 0.0
    %474 = vmatpush1.msra.mxu0 0.0
    %475 = vmatprep.subr.mxu0 0.0
    %476 = vmatpush1.msra.mxu0 0.0
    %477 = vmatprep.subr.mxu0 0.0
    %478 = vmatpush1.msra.mxu0 0.0
    %479 = vmatprep.subr.mxu0 0.0
    %480 = vmatpush1.msra.mxu0 0.0
    %481 = vmatprep.subr.mxu0 0.0
    %482 = vmatpush1.msra.mxu0 0.0
    %483 = vmatprep.subr.mxu0 0.0
    %484 = vmatpush1.msra.mxu0 0.0
    %485 = vmatprep.subr.mxu0 0.0
    %486 = vmatpush1.msra.mxu0 0.0
    %487 = vmatprep.mubr.f32.mxu0 0.0
    %488 = vmatmul.mubr.f32.gmra.mrb[0].mxu0 %v419
    %v489 = vpop.f32.mrb[0].mxu0
    %v490 = vadd.f32 0.0, %v489
    %v491 = vpop.f32.mrb[0].mxu0
    %492 = vdwg.mxu0
    %v493 = vadd.f32 %v413, %v490
    %s494 = scalar_lea.vmem %s1, 48
    %v495 = vld [vmem:[%s494] sm:$0xff]
    %496 = vrot.lane.b32.xlu0 %v16, 108
    %v497 = vpop.permute.xlu0 %496
    %v499 = vsel %vm22, %v495, 0
    %v501 = vsel %vm26, %v497, 0
    %503 = vmatprep.subr.mxu0 0.0
    %504 = vmatpush1.msra.mxu0 %v501
    %505 = vmatprep.subr.mxu0 0.0
    %506 = vmatpush1.msra.mxu0 0.0
    %507 = vmatprep.subr.mxu0 0.0
    %508 = vmatpush1.msra.mxu0 0.0
    %509 = vmatprep.subr.mxu0 0.0
    %510 = vmatpush1.msra.mxu0 0.0
    %511 = vmatprep.subr.mxu0 0.0
    %512 = vmatpush1.msra.mxu0 0.0
    %513 = vmatprep.subr.mxu0 0.0
    %514 = vmatpush1.msra.mxu0 0.0
    %515 = vmatprep.subr.mxu0 0.0
    %516 = vmatpush1.msra.mxu0 0.0
    %517 = vmatprep.subr.mxu0 0.0
    %518 = vmatpush1.msra.mxu0 0.0
    %519 = vmatprep.subr.mxu0 0.0
    %520 = vmatpush1.msra.mxu0 0.0
    %521 = vmatprep.subr.mxu0 0.0
    %522 = vmatpush1.msra.mxu0 0.0
    %523 = vmatprep.subr.mxu0 0.0
    %524 = vmatpush1.msra.mxu0 0.0
    %525 = vmatprep.subr.mxu0 0.0
    %526 = vmatpush1.msra.mxu0 0.0
    %527 = vmatprep.subr.mxu0 0.0
    %528 = vmatpush1.msra.mxu0 0.0
    %529 = vmatprep.subr.mxu0 0.0
    %530 = vmatpush1.msra.mxu0 0.0
    %531 = vmatprep.subr.mxu0 0.0
    %532 = vmatpush1.msra.mxu0 0.0
    %533 = vmatprep.subr.mxu0 0.0
    %534 = vmatpush1.msra.mxu0 0.0
    %535 = vmatprep.subr.mxu0 0.0
    %536 = vmatpush1.msra.mxu0 0.0
    %537 = vmatprep.subr.mxu0 0.0
    %538 = vmatpush1.msra.mxu0 0.0
    %539 = vmatprep.subr.mxu0 0.0
    %540 = vmatpush1.msra.mxu0 0.0
    %541 = vmatprep.subr.mxu0 0.0
    %542 = vmatpush1.msra.mxu0 0.0
    %543 = vmatprep.subr.mxu0 0.0
    %544 = vmatpush1.msra.mxu0 0.0
    %545 = vmatprep.subr.mxu0 0.0
    %546 = vmatpush1.msra.mxu0 0.0
    %547 = vmatprep.subr.mxu0 0.0
    %548 = vmatpush1.msra.mxu0 0.0
    %549 = vmatprep.subr.mxu0 0.0
    %550 = vmatpush1.msra.mxu0 0.0
    %551 = vmatprep.subr.mxu0 0.0
    %552 = vmatpush1.msra.mxu0 0.0
    %553 = vmatprep.subr.mxu0 0.0
    %554 = vmatpush1.msra.mxu0 0.0
    %555 = vmatprep.subr.mxu0 0.0
    %556 = vmatpush1.msra.mxu0 0.0
    %557 = vmatprep.subr.mxu0 0.0
    %558 = vmatpush1.msra.mxu0 0.0
    %559 = vmatprep.subr.mxu0 0.0
    %560 = vmatpush1.msra.mxu0 0.0
    %561 = vmatprep.subr.mxu0 0.0
    %562 = vmatpush1.msra.mxu0 0.0
    %563 = vmatprep.subr.mxu0 0.0
    %564 = vmatpush1.msra.mxu0 0.0
    %565 = vmatprep.subr.mxu0 0.0
    %566 = vmatpush1.msra.mxu0 0.0
    %567 = vmatprep.mubr.f32.mxu0 0.0
    %568 = vmatmul.mubr.f32.gmra.mrb[0].mxu0 %v499
    %v569 = vpop.f32.mrb[0].mxu0
    %v570 = vadd.f32 0.0, %v569
    %v571 = vpop.f32.mrb[0].mxu0
    %572 = vdwg.mxu0
    %v573 = vadd.f32 %v493, %v570
    %s574 = scalar_lea.vmem %s1, 56
    %v575 = vld [vmem:[%s574] sm:$0xff]
    %576 = vrot.lane.b32.xlu0 %v16, 107
    %v577 = vpop.permute.xlu0 %576
    %v579 = vsel %vm22, %v575, 0
    %v581 = vsel %vm26, %v577, 0
    %583 = vmatprep.subr.mxu0 0.0
    %584 = vmatpush1.msra.mxu0 %v581
    %585 = vmatprep.subr.mxu0 0.0
    %586 = vmatpush1.msra.mxu0 0.0
    %587 = vmatprep.subr.mxu0 0.0
    %588 = vmatpush1.msra.mxu0 0.0
    %589 = vmatprep.subr.mxu0 0.0
    %590 = vmatpush1.msra.mxu0 0.0
    %591 = vmatprep.subr.mxu0 0.0
    %592 = vmatpush1.msra.mxu0 0.0
    %593 = vmatprep.subr.mxu0 0.0
    %594 = vmatpush1.msra.mxu0 0.0
    %595 = vmatprep.subr.mxu0 0.0
    %596 = vmatpush1.msra.mxu0 0.0
    %597 = vmatprep.subr.mxu0 0.0
    %598 = vmatpush1.msra.mxu0 0.0
    %599 = vmatprep.subr.mxu0 0.0
    %600 = vmatpush1.msra.mxu0 0.0
    %601 = vmatprep.subr.mxu0 0.0
    %602 = vmatpush1.msra.mxu0 0.0
    %603 = vmatprep.subr.mxu0 0.0
    %604 = vmatpush1.msra.mxu0 0.0
    %605 = vmatprep.subr.mxu0 0.0
    %606 = vmatpush1.msra.mxu0 0.0
    %607 = vmatprep.subr.mxu0 0.0
    %608 = vmatpush1.msra.mxu0 0.0
    %609 = vmatprep.subr.mxu0 0.0
    %610 = vmatpush1.msra.mxu0 0.0
    %611 = vmatprep.subr.mxu0 0.0
    %612 = vmatpush1.msra.mxu0 0.0
    %613 = vmatprep.subr.mxu0 0.0
    %614 = vmatpush1.msra.mxu0 0.0
    %615 = vmatprep.subr.mxu0 0.0
    %616 = vmatpush1.msra.mxu0 0.0
    %617 = vmatprep.subr.mxu0 0.0
    %618 = vmatpush1.msra.mxu0 0.0
    %619 = vmatprep.subr.mxu0 0.0
    %620 = vmatpush1.msra.mxu0 0.0
    %621 = vmatprep.subr.mxu0 0.0
    %622 = vmatpush1.msra.mxu0 0.0
    %623 = vmatprep.subr.mxu0 0.0
    %624 = vmatpush1.msra.mxu0 0.0
    %625 = vmatprep.subr.mxu0 0.0
    %626 = vmatpush1.msra.mxu0 0.0
    %627 = vmatprep.subr.mxu0 0.0
    %628 = vmatpush1.msra.mxu0 0.0
    %629 = vmatprep.subr.mxu0 0.0
    %630 = vmatpush1.msra.mxu0 0.0
    %631 = vmatprep.subr.mxu0 0.0
    %632 = vmatpush1.msra.mxu0 0.0
    %633 = vmatprep.subr.mxu0 0.0
    %634 = vmatpush1.msra.mxu0 0.0
    %635 = vmatprep.subr.mxu0 0.0
    %636 = vmatpush1.msra.mxu0 0.0
    %637 = vmatprep.subr.mxu0 0.0
    %638 = vmatpush1.msra.mxu0 0.0
    %639 = vmatprep.subr.mxu0 0.0
    %640 = vmatpush1.msra.mxu0 0.0
    %641 = vmatprep.subr.mxu0 0.0
    %642 = vmatpush1.msra.mxu0 0.0
    %643 = vmatprep.subr.mxu0 0.0
    %644 = vmatpush1.msra.mxu0 0.0
    %645 = vmatprep.subr.mxu0 0.0
    %646 = vmatpush1.msra.mxu0 0.0
    %647 = vmatprep.mubr.f32.mxu0 0.0
    %648 = vmatmul.mubr.f32.gmra.mrb[0].mxu0 %v579
    %v649 = vpop.f32.mrb[0].mxu0
    %v650 = vadd.f32 0.0, %v649
    %v651 = vpop.f32.mrb[0].mxu0
    %652 = vdwg.mxu0
    %v653 = vadd.f32 %v573, %v650
    %s654 = scalar_lea.vmem %s1, 64
    %v655 = vld [vmem:[%s654] sm:$0xff]
    %656 = vrot.lane.b32.xlu0 %v16, 106
    %v657 = vpop.permute.xlu0 %656
    %v659 = vsel %vm22, %v655, 0
    %v661 = vsel %vm26, %v657, 0
    %663 = vmatprep.subr.mxu0 0.0
    %664 = vmatpush1.msra.mxu0 %v661
    %665 = vmatprep.subr.mxu0 0.0
    %666 = vmatpush1.msra.mxu0 0.0
    %667 = vmatprep.subr.mxu0 0.0
    %668 = vmatpush1.msra.mxu0 0.0
    %669 = vmatprep.subr.mxu0 0.0
    %670 = vmatpush1.msra.mxu0 0.0
    %671 = vmatprep.subr.mxu0 0.0
    %672 = vmatpush1.msra.mxu0 0.0
    %673 = vmatprep.subr.mxu0 0.0
    %674 = vmatpush1.msra.mxu0 0.0
    %675 = vmatprep.subr.mxu0 0.0
    %676 = vmatpush1.msra.mxu0 0.0
    %677 = vmatprep.subr.mxu0 0.0
    %678 = vmatpush1.msra.mxu0 0.0
    %679 = vmatprep.subr.mxu0 0.0
    %680 = vmatpush1.msra.mxu0 0.0
    %681 = vmatprep.subr.mxu0 0.0
    %682 = vmatpush1.msra.mxu0 0.0
    %683 = vmatprep.subr.mxu0 0.0
    %684 = vmatpush1.msra.mxu0 0.0
    %685 = vmatprep.subr.mxu0 0.0
    %686 = vmatpush1.msra.mxu0 0.0
    %687 = vmatprep.subr.mxu0 0.0
    %688 = vmatpush1.msra.mxu0 0.0
    %689 = vmatprep.subr.mxu0 0.0
    %690 = vmatpush1.msra.mxu0 0.0
    %691 = vmatprep.subr.mxu0 0.0
    %692 = vmatpush1.msra.mxu0 0.0
    %693 = vmatprep.subr.mxu0 0.0
    %694 = vmatpush1.msra.mxu0 0.0
    %695 = vmatprep.subr.mxu0 0.0
    %696 = vmatpush1.msra.mxu0 0.0
    %697 = vmatprep.subr.mxu0 0.0
    %698 = vmatpush1.msra.mxu0 0.0
    %699 = vmatprep.subr.mxu0 0.0
    %700 = vmatpush1.msra.mxu0 0.0
    %701 = vmatprep.subr.mxu0 0.0
    %702 = vmatpush1.msra.mxu0 0.0
    %703 = vmatprep.subr.mxu0 0.0
    %704 = vmatpush1.msra.mxu0 0.0
    %705 = vmatprep.subr.mxu0 0.0
    %706 = vmatpush1.msra.mxu0 0.0
    %707 = vmatprep.subr.mxu0 0.0
    %708 = vmatpush1.msra.mxu0 0.0
    %709 = vmatprep.subr.mxu0 0.0
    %710 = vmatpush1.msra.mxu0 0.0
    %711 = vmatprep.subr.mxu0 0.0
    %712 = vmatpush1.msra.mxu0 0.0
    %713 = vmatprep.subr.mxu0 0.0
    %714 = vmatpush1.msra.mxu0 0.0
    %715 = vmatprep.subr.mxu0 0.0
    %716 = vmatpush1.msra.mxu0 0.0
    %717 = vmatprep.subr.mxu0 0.0
    %718 = vmatpush1.msra.mxu0 0.0
    %719 = vmatprep.subr.mxu0 0.0
    %720 = vmatpush1.msra.mxu0 0.0
    %721 = vmatprep.subr.mxu0 0.0
    %722 = vmatpush1.msra.mxu0 0.0
    %723 = vmatprep.subr.mxu0 0.0
    %724 = vmatpush1.msra.mxu0 0.0
    %725 = vmatprep.subr.mxu0 0.0
    %726 = vmatpush1.msra.mxu0 0.0
    %727 = vmatprep.mubr.f32.mxu0 0.0
    %728 = vmatmul.mubr.f32.gmra.mrb[0].mxu0 %v659
    %v729 = vpop.f32.mrb[0].mxu0
    %v730 = vadd.f32 0.0, %v729
    %v731 = vpop.f32.mrb[0].mxu0
    %732 = vdwg.mxu0
    %v733 = vadd.f32 %v653, %v730
    %v734 = vld [vmem:[%s2] sm:$0xff]
    %736 = vset.pattern.permute.xlu0 0
    %737 = vperm.xlu0 %736, %v734
    %v738 = vpop.permute.xlu0 %737
    %v740 = vadd.f32 %v733, %v738
    %vm741 = vcmask 654336
    %742 = vst.msk [vmem:[#allocation2] sm:$0xff] %vm741, %v740
    // Predicated region
    $region14: #{tpu_custom_call.1} parent=1 // pred_check
      _
    $region15: #{tpu_custom_call.1} parent=1 // pred_check_branch
      %744 = sbr.rel (0) target = $region17
    $region16: #{tpu_custom_call.1} parent=1 // pred_region
      %s746 = ssub.s32 128, 128
      %747 = vsyncadd [#allocation3], %s746
      %s749 = sshll.u32 [#allocation2], 4
      %s750 = int_to_ptr.vmem [resolvable:$true] %s749
      %752 = dma.vmem_to_hbm [thread:$0]  %s750, 128, %s3, [#allocation3]
    $region17: #{tpu_custom_call.1} parent=1 // pred_fallthru
      _
    // Predicated region
    $region18: #{tpu_custom_call.1} parent=1 // pred_check
      _
    $region19: #{tpu_custom_call.1} parent=1 // pred_check_branch
      %754 = sbr.rel (0) target = $region21
    $region20: #{tpu_custom_call.1} parent=1 // pred_region
      %755 = dma.done [#allocation3], 128
    $region21: #{tpu_custom_call.1} parent=1 // pred_fallthru
      _
    %756 = vsyncpa [#allocation3], 1

// kernel: forward.3
$region0: #{forward.3}
  #allocation0 [shape = 'u32[]', space=smem, size = 0x4, offset = 0x4, fixed_abs, tag = 'smem constant byte address 0x4 - core index']
  #allocation1 [shape = 'u32[144,128]{1,0:T(1,128)}', space=vmem, size = 0x12000, scoped, tag = 'internal scratch']
  %s0 = inlined_call_operand.vmem [shape: f32[8,36], index: 0, kind: input, shape index: {}]
  %s1 = inlined_call_operand.vmem [shape: f32[36,512], index: 1, kind: input, shape index: {}]
  %s2 = inlined_call_operand.vmem [shape: f32[8,1], index: 2, kind: input, shape index: {}]
  %s3 = inlined_call_operand.vmem [shape: f32[8,512], index: 3, kind: output, shape index: {}]
  %s4 = sld [smem:[#allocation0]]
  $region22: #{forward.3} parent=0
    _
  %s6 = ssub.s32 1, %s4
  %s7 = scalar_select 0, %s6, %s4
  // Predicated region
  $region2: #{forward.3} parent=0 // pred_check
    _
  $region3: #{forward.3} parent=0 // pred_check_branch
    %9 = sbr.rel (0) target = $region5
  $region4: #{forward.3} parent=0 // pred_region
    _
  $region5: #{forward.3} parent=0 // pred_fallthru
    _
  // Predicated region
  $region6: #{forward.3} parent=0 // pred_check
    _
  $region7: #{forward.3} parent=0 // pred_check_branch
    %11 = sbr.rel (0) target = $region9
  $region8: #{forward.3} parent=0 // pred_region
    _
  $region9: #{forward.3} parent=0 // pred_fallthru
    _
  // Predicated region
  $region10: #{forward.3} parent=0 // pred_check
    _
  $region11: #{forward.3} parent=0 // pred_check_branch
    %13 = sbr.rel (0) target = $region13
  $region12: #{forward.3} parent=0 // pred_region
    _
  $region13: #{forward.3} parent=0 // pred_fallthru
    _
  %v14 = vld [vmem:[%s0] sm:$0xff]
  %v15 = vld [vmem:[%s1] sm:$0xff]
  %v16 = vld [vmem:[%s1 + $0x8] sm:$0xff]
  %v17 = vld [vmem:[%s1 + $0x10] sm:$0xff]
  %v18 = vld [vmem:[%s1 + $0x18] sm:$0xff]
  %v19 = vld [vmem:[%s1 + $0x20] sm:$0xff]
  %v20 = vld [vmem:[%s1 + $0x28] sm:$0xff]
  %v21 = vld [vmem:[%s1 + $0x30] sm:$0xff]
  %v22 = vld [vmem:[%s1 + $0x38] sm:$0xff]
  %v23 = vld [vmem:[%s1 + $0x40] sm:$0xff]
  %v24 = vld [vmem:[%s1 + $0x48] sm:$0xff]
  %v25 = vld [vmem:[%s1 + $0x50] sm:$0xff]
  %v26 = vld [vmem:[%s1 + $0x58] sm:$0xff]
  %v27 = vld [vmem:[%s1 + $0x60] sm:$0xff]
  %v28 = vld [vmem:[%s1 + $0x68] sm:$0xff]
  %v29 = vld [vmem:[%s1 + $0x70] sm:$0xff]
  %v30 = vld [vmem:[%s1 + $0x78] sm:$0xff]
  %v31 = vld [vmem:[%s1 + $0x80] sm:$0xf]
  %v32 = vld [vmem:[%s1 + $0x88] sm:$0xf]
  %v33 = vld [vmem:[%s1 + $0x90] sm:$0xf]
  %v34 = vld [vmem:[%s1 + $0x98] sm:$0xf]
  %v35 = vld [vmem:[%s2] sm:$0xff]
  %37 = vset.pattern.permute.xlu0 0
  %38 = vperm.xlu0 %37, %v35
  %v39 = vpop.permute.xlu0 %38
  %vm41 = vcmask 293888
  %v43 = vsel %vm41, %v14, 0
  %vm45 = vcmask 1043456
  %v47 = vsel %vm45, %v31, 0
  %v50 = vsel %vm45, %v32, 0
  %v53 = vsel %vm45, %v33, 0
  %v56 = vsel %vm45, %v34, 0
  %58 = vmatprep.subr.mxu0 %v16
  %59 = vmatpush1.msra.mxu0 %v15
  %60 = vmatprep.subr.mxu0 %v20
  %61 = vmatpush1.msra.mxu0 %v19
  %62 = vmatprep.subr.mxu0 %v24
  %63 = vmatpush1.msra.mxu0 %v23
  %64 = vmatprep.subr.mxu0 %v28
  %65 = vmatpush1.msra.mxu0 %v27
  %66 = vmatprep.subr.mxu0 %v50
  %67 = vmatpush1.msra.mxu0 %v47
  %68 = vmatprep.subr.mxu0 0.0
  %69 = vmatpush1.msra.mxu0 0.0
  %70 = vmatprep.subr.mxu0 0.0
  %71 = vmatpush1.msra.mxu0 0.0
  %72 = vmatprep.subr.mxu0 0.0
  %73 = vmatpush1.msra.mxu0 0.0
  %74 = vmatprep.subr.mxu0 0.0
  %75 = vmatpush1.msra.mxu0 0.0
  %76 = vmatprep.subr.mxu0 0.0
  %77 = vmatpush1.msra.mxu0 0.0
  %78 = vmatprep.subr.mxu0 0.0
  %79 = vmatpush1.msra.mxu0 0.0
  %80 = vmatprep.subr.mxu0 0.0
  %81 = vmatpush1.msra.mxu0 0.0
  %82 = vmatprep.subr.mxu0 0.0
  %83 = vmatpush1.msra.mxu0 0.0
  %84 = vmatprep.subr.mxu0 0.0
  %85 = vmatpush1.msra.mxu0 0.0
  %86 = vmatprep.subr.mxu0 0.0
  %87 = vmatpush1.msra.mxu0 0.0
  %88 = vmatprep.subr.mxu0 0.0
  %89 = vmatpush1.msra.mxu0 0.0
  %90 = vmatprep.subr.mxu0 0.0
  %91 = vmatpush1.msra.mxu0 0.0
  %92 = vmatprep.subr.mxu0 0.0
  %93 = vmatpush1.msra.mxu0 0.0
  %94 = vmatprep.subr.mxu0 0.0
  %95 = vmatpush1.msra.mxu0 0.0
  %96 = vmatprep.subr.mxu0 0.0
  %97 = vmatpush1.msra.mxu0 0.0
  %98 = vmatprep.subr.mxu0 0.0
  %99 = vmatpush1.msra.mxu0 0.0
  %100 = vmatprep.subr.mxu0 0.0
  %101 = vmatpush1.msra.mxu0 0.0
  %102 = vmatprep.subr.mxu0 0.0
  %103 = vmatpush1.msra.mxu0 0.0
  %104 = vmatprep.subr.mxu0 0.0
  %105 = vmatpush1.msra.mxu0 0.0
  %106 = vmatprep.subr.mxu0 0.0
  %107 = vmatpush1.msra.mxu0 0.0
  %108 = vmatprep.subr.mxu0 0.0
  %109 = vmatpush1.msra.mxu0 0.0
  %110 = vmatprep.subr.mxu0 0.0
  %111 = vmatpush1.msra.mxu0 0.0
  %112 = vmatprep.subr.mxu0 0.0
  %113 = vmatpush1.msra.mxu0 0.0
  %114 = vmatprep.subr.mxu0 0.0
  %115 = vmatpush1.msra.mxu0 0.0
  %116 = vmatprep.subr.mxu0 0.0
  %117 = vmatpush1.msra.mxu0 0.0
  %118 = vmatprep.subr.mxu0 0.0
  %119 = vmatpush1.msra.mxu0 0.0
  %120 = vmatprep.subr.mxu0 0.0
  %121 = vmatpush1.msra.mxu0 0.0
  %122 = vmatprep.mubr.f32.mxu0 0.0
  %123 = vmatmul.mubr.f32.gmra.mrb[0].mxu0 %v43
  %v124 = vpop.f32.mrb[0].mxu0
  %v125 = vadd.f32 %v39, %v124
  %v126 = vpop.f32.mrb[0].mxu0
  %v127 = vadd.f32 %v39, %v126
  %128 = vdwg.mxu0
  %129 = vmatprep.subr.mxu0 %v18
  %130 = vmatpush1.msra.mxu0 %v17
  %131 = vmatprep.subr.mxu0 %v22
  %132 = vmatpush1.msra.mxu0 %v21
  %133 = vmatprep.subr.mxu0 %v26
  %134 = vmatpush1.msra.mxu0 %v25
  %135 = vmatprep.subr.mxu0 %v30
  %136 = vmatpush1.msra.mxu0 %v29
  %137 = vmatprep.subr.mxu0 %v56
  %138 = vmatpush1.msra.mxu0 %v53
  %139 = vmatprep.subr.mxu0 0.0
  %140 = vmatpush1.msra.mxu0 0.0
  %141 = vmatprep.subr.mxu0 0.0
  %142 = vmatpush1.msra.mxu0 0.0
  %143 = vmatprep.subr.mxu0 0.0
  %144 = vmatpush1.msra.mxu0 0.0
  %145 = vmatprep.subr.mxu0 0.0
  %146 = vmatpush1.msra.mxu0 0.0
  %147 = vmatprep.subr.mxu0 0.0
  %148 = vmatpush1.msra.mxu0 0.0
  %149 = vmatprep.subr.mxu0 0.0
  %150 = vmatpush1.msra.mxu0 0.0
  %151 = vmatprep.subr.mxu0 0.0
  %152 = vmatpush1.msra.mxu0 0.0
  %153 = vmatprep.subr.mxu0 0.0
  %154 = vmatpush1.msra.mxu0 0.0
  %155 = vmatprep.subr.mxu0 0.0
  %156 = vmatpush1.msra.mxu0 0.0
  %157 = vmatprep.subr.mxu0 0.0
  %158 = vmatpush1.msra.mxu0 0.0
  %159 = vmatprep.subr.mxu0 0.0
  %160 = vmatpush1.msra.mxu0 0.0
  %161 = vmatprep.subr.mxu0 0.0
  %162 = vmatpush1.msra.mxu0 0.0
  %163 = vmatprep.subr.mxu0 0.0
  %164 = vmatpush1.msra.mxu0 0.0
  %165 = vmatprep.subr.mxu0 0.0
  %166 = vmatpush1.msra.mxu0 0.0
  %167 = vmatprep.subr.mxu0 0.0
  %168 = vmatpush1.msra.mxu0 0.0
  %169 = vmatprep.subr.mxu0 0.0
  %170 = vmatpush1.msra.mxu0 0.0
  %171 = vmatprep.subr.mxu0 0.0
  %172 = vmatpush1.msra.mxu0 0.0
  %173 = vmatprep.subr.mxu0 0.0
  %174 = vmatpush1.msra.mxu0 0.0
  %175 = vmatprep.subr.mxu0 0.0
  %176 = vmatpush1.msra.mxu0 0.0
  %177 = vmatprep.subr.mxu0 0.0
  %178 = vmatpush1.msra.mxu0 0.0
  %179 = vmatprep.subr.mxu0 0.0
  %180 = vmatpush1.msra.mxu0 0.0
  %181 = vmatprep.subr.mxu0 0.0
  %182 = vmatpush1.msra.mxu0 0.0
  %183 = vmatprep.subr.mxu0 0.0
  %184 = vmatpush1.msra.mxu0 0.0
  %185 = vmatprep.subr.mxu0 0.0
  %186 = vmatpush1.msra.mxu0 0.0
  %187 = vmatprep.subr.mxu0 0.0
  %188 = vmatpush1.msra.mxu0 0.0
  %189 = vmatprep.subr.mxu0 0.0
  %190 = vmatpush1.msra.mxu0 0.0
  %191 = vmatprep.subr.mxu0 0.0
  %192 = vmatpush1.msra.mxu0 0.0
  %193 = vmatprep.mubr.f32.mxu0 0.0
  %194 = vmatmul.mubr.f32.gmra.mrb[0].mxu0 %v43
  %v195 = vpop.f32.mrb[0].mxu0
  %v196 = vadd.f32 %v39, %v195
  %v197 = vpop.f32.mrb[0].mxu0
  %v198 = vadd.f32 %v39, %v197
  %199 = vdwg.mxu0
  %200 = vst [vmem:[%s3] sm:$0xff] %v125
  %201 = vst [vmem:[%s3 + $0x8] sm:$0xff] %v127
  %202 = vst [vmem:[%s3 + $0x10] sm:$0xff] %v196
  %203 = vst [vmem:[%s3 + $0x18] sm:$0xff] %v198
  // Predicated region
  $region14: #{forward.3} parent=0 // pred_check
    _
  $region15: #{forward.3} parent=0 // pred_check_branch
    %205 = sbr.rel (0) target = $region17
  $region16: #{forward.3} parent=0 // pred_region
    _
  $region17: #{forward.3} parent=0 // pred_fallthru
    _
  // Predicated region
  $region18: #{forward.3} parent=0 // pred_check
    _
  $region19: #{forward.3} parent=0 // pred_check_branch
    %207 = sbr.rel (0) target = $region21
  $region20: #{forward.3} parent=0 // pred_region
    _
  $region21: #{forward.3} parent=0 // pred_fallthru
    _

// kernel: forward.4
$region0: #{forward.4}
  #allocation0 [shape = 'u32[]', space=smem, size = 0x4, offset = 0x4, fixed_abs, tag = 'smem constant byte address 0x4 - core index']
  #allocation1 [shape = 'u32[144,128]{1,0:T(1,128)}', space=vmem, size = 0x12000, scoped, tag = 'internal scratch']
  %s0 = inlined_call_operand.vmem [shape: f32[16,72], index: 0, kind: input, shape index: {}]
  %s1 = inlined_call_operand.vmem [shape: f32[72,512], index: 1, kind: input, shape index: {}]
  %s2 = inlined_call_operand.vmem [shape: f32[16,1], index: 2, kind: input, shape index: {}]
  %s3 = inlined_call_operand.vmem [shape: f32[16,512], index: 3, kind: output, shape index: {}]
  %s4 = sld [smem:[#allocation0]]
  $region22: #{forward.4} parent=0
    _
  %s6 = ssub.s32 1, %s4
  %s7 = scalar_select 0, %s6, %s4
  // Predicated region
  $region2: #{forward.4} parent=0 // pred_check
    _
  $region3: #{forward.4} parent=0 // pred_check_branch
    %9 = sbr.rel (0) target = $region5
  $region4: #{forward.4} parent=0 // pred_region
    _
  $region5: #{forward.4} parent=0 // pred_fallthru
    _
  // Predicated region
  $region6: #{forward.4} parent=0 // pred_check
    _
  $region7: #{forward.4} parent=0 // pred_check_branch
    %11 = sbr.rel (0) target = $region9
  $region8: #{forward.4} parent=0 // pred_region
    _
  $region9: #{forward.4} parent=0 // pred_fallthru
    _
  // Predicated region
  $region10: #{forward.4} parent=0 // pred_check
    _
  $region11: #{forward.4} parent=0 // pred_check_branch
    %13 = sbr.rel (0) target = $region13
  $region12: #{forward.4} parent=0 // pred_region
    _
  $region13: #{forward.4} parent=0 // pred_fallthru
    _
  %v14 = vld [vmem:[%s0] sm:$0xff]
  %v15 = vld [vmem:[%s0 + $0x8] sm:$0xff]
  %v16 = vld [vmem:[%s1] sm:$0xff]
  %v17 = vld [vmem:[%s1 + $0x8] sm:$0xff]
  %v18 = vld [vmem:[%s1 + $0x10] sm:$0xff]
  %v19 = vld [vmem:[%s1 + $0x18] sm:$0xff]
  %v20 = vld [vmem:[%s1 + $0x20] sm:$0xff]
  %v21 = vld [vmem:[%s1 + $0x28] sm:$0xff]
  %v22 = vld [vmem:[%s1 + $0x30] sm:$0xff]
  %v23 = vld [vmem:[%s1 + $0x38] sm:$0xff]
  %v24 = vld [vmem:[%s1 + $0x40] sm:$0xff]
  %v25 = vld [vmem:[%s1 + $0x48] sm:$0xff]
  %v26 = vld [vmem:[%s1 + $0x50] sm:$0xff]
  %v27 = vld [vmem:[%s1 + $0x58] sm:$0xff]
  %v28 = vld [vmem:[%s1 + $0x60] sm:$0xff]
  %v29 = vld [vmem:[%s1 + $0x68] sm:$0xff]
  %v30 = vld [vmem:[%s1 + $0x70] sm:$0xff]
  %v31 = vld [vmem:[%s1 + $0x78] sm:$0xff]
  %v32 = vld [vmem:[%s1 + $0x80] sm:$0xff]
  %v33 = vld [vmem:[%s1 + $0x88] sm:$0xff]
  %v34 = vld [vmem:[%s1 + $0x90] sm:$0xff]
  %v35 = vld [vmem:[%s1 + $0x98] sm:$0xff]
  %v36 = vld [vmem:[%s1 + $0xa0] sm:$0xff]
  %v37 = vld [vmem:[%s1 + $0xa8] sm:$0xff]
  %v38 = vld [vmem:[%s1 + $0xb0] sm:$0xff]
  %v39 = vld [vmem:[%s1 + $0xb8] sm:$0xff]
  %v40 = vld [vmem:[%s1 + $0xc0] sm:$0xff]
  %v41 = vld [vmem:[%s1 + $0xc8] sm:$0xff]
  %v42 = vld [vmem:[%s1 + $0xd0] sm:$0xff]
  %v43 = vld [vmem:[%s1 + $0xd8] sm:$0xff]
  %v44 = vld [vmem:[%s1 + $0xe0] sm:$0xff]
  %v45 = vld [vmem:[%s1 + $0xe8] sm:$0xff]
  %v46 = vld [vmem:[%s1 + $0xf0] sm:$0xff]
  %v47 = vld [vmem:[%s1 + $0xf8] sm:$0xff]
  %v48 = vld [vmem:[%s1 + $0x100] sm:$0xff]
  %v49 = vld [vmem:[%s1 + $0x108] sm:$0xff]
  %v50 = vld [vmem:[%s1 + $0x110] sm:$0xff]
  %v51 = vld [vmem:[%s1 + $0x118] sm:$0xff]
  %v52 = vld [vmem:[%s2] sm:$0xff]
  %v53 = vld [vmem:[%s2 + $0x8] sm:$0xff]
  %55 = vset.pattern.permute.xlu0 0
  %56 = vperm.xlu0 %55, %v52
  %v57 = vpop.permute.xlu0 %56
  %60 = vset.pattern.permute.xlu0 0
  %61 = vperm.xlu0 %60, %v53
  %v62 = vpop.permute.xlu0 %61
  %vm64 = vcmask 588800
  %v66 = vsel %vm64, %v14, 0
  %v69 = vsel %vm64, %v15, 0
  %71 = vmatprep.subr.mxu0 %v17
  %72 = vmatpush1.msra.mxu0 %v16
  %73 = vmatprep.subr.mxu0 %v21
  %74 = vmatpush1.msra.mxu0 %v20
  %75 = vmatprep.subr.mxu0 %v25
  %76 = vmatpush1.msra.mxu0 %v24
  %77 = vmatprep.subr.mxu0 %v29
  %78 = vmatpush1.msra.mxu0 %v28
  %79 = vmatprep.subr.mxu0 %v33
  %80 = vmatpush1.msra.mxu0 %v32
  %81 = vmatprep.subr.mxu0 %v37
  %82 = vmatpush1.msra.mxu0 %v36
  %83 = vmatprep.subr.mxu0 %v41
  %84 = vmatpush1.msra.mxu0 %v40
  %85 = vmatprep.subr.mxu0 %v45
  %86 = vmatpush1.msra.mxu0 %v44
  %87 = vmatprep.subr.mxu0 %v49
  %88 = vmatpush1.msra.mxu0 %v48
  %89 = vmatprep.subr.mxu0 0.0
  %90 = vmatpush1.msra.mxu0 0.0
  %91 = vmatprep.subr.mxu0 0.0
  %92 = vmatpush1.msra.mxu0 0.0
  %93 = vmatprep.subr.mxu0 0.0
  %94 = vmatpush1.msra.mxu0 0.0
  %95 = vmatprep.subr.mxu0 0.0
  %96 = vmatpush1.msra.mxu0 0.0
  %97 = vmatprep.subr.mxu0 0.0
  %98 = vmatpush1.msra.mxu0 0.0
  %99 = vmatprep.subr.mxu0 0.0
  %100 = vmatpush1.msra.mxu0 0.0
  %101 = vmatprep.subr.mxu0 0.0
  %102 = vmatpush1.msra.mxu0 0.0
  %103 = vmatprep.subr.mxu0 0.0
  %104 = vmatpush1.msra.mxu0 0.0
  %105 = vmatprep.subr.mxu0 0.0
  %106 = vmatpush1.msra.mxu0 0.0
  %107 = vmatprep.subr.mxu0 0.0
  %108 = vmatpush1.msra.mxu0 0.0
  %109 = vmatprep.subr.mxu0 0.0
  %110 = vmatpush1.msra.mxu0 0.0
  %111 = vmatprep.subr.mxu0 0.0
  %112 = vmatpush1.msra.mxu0 0.0
  %113 = vmatprep.subr.mxu0 0.0
  %114 = vmatpush1.msra.mxu0 0.0
  %115 = vmatprep.subr.mxu0 0.0
  %116 = vmatpush1.msra.mxu0 0.0
  %117 = vmatprep.subr.mxu0 0.0
  %118 = vmatpush1.msra.mxu0 0.0
  %119 = vmatprep.subr.mxu0 0.0
  %120 = vmatpush1.msra.mxu0 0.0
  %121 = vmatprep.subr.mxu0 0.0
  %122 = vmatpush1.msra.mxu0 0.0
  %123 = vmatprep.subr.mxu0 0.0
  %124 = vmatpush1.msra.mxu0 0.0
  %125 = vmatprep.subr.mxu0 0.0
  %126 = vmatpush1.msra.mxu0 0.0
  %127 = vmatprep.subr.mxu0 0.0
  %128 = vmatpush1.msra.mxu0 0.0
  %129 = vmatprep.subr.mxu0 0.0
  %130 = vmatpush1.msra.mxu0 0.0
  %131 = vmatprep.subr.mxu0 0.0
  %132 = vmatpush1.msra.mxu0 0.0
  %133 = vmatprep.subr.mxu0 0.0
  %134 = vmatpush1.msra.mxu0 0.0
  %135 = vmatprep.mubr.f32.mxu0 0.0
  %136 = vmatmul.mubr.f32.gmra.mrb[0].mxu0 %v66
  %v137 = vpop.f32.mrb[0].mxu0
  %v138 = vadd.f32 %v57, %v137
  %v139 = vpop.f32.mrb[0].mxu0
  %v140 = vadd.f32 %v57, %v139
  %141 = vmatprep.mubr.f32.mxu0 0.0
  %142 = vmatmul.mubr.f32.gmra.mrb[0].mxu0 %v69
  %v143 = vpop.f32.mrb[0].mxu0
  %v144 = vadd.f32 %v62, %v143
  %v145 = vpop.f32.mrb[0].mxu0
  %v146 = vadd.f32 %v62, %v145
  %147 = vdwg.mxu0
  %148 = vmatprep.subr.mxu0 %v19
  %149 = vmatpush1.msra.mxu0 %v18
  %150 = vmatprep.subr.mxu0 %v23
  %151 = vmatpush1.msra.mxu0 %v22
  %152 = vmatprep.subr.mxu0 %v27
  %153 = vmatpush1.msra.mxu0 %v26
  %154 = vmatprep.subr.mxu0 %v31
  %155 = vmatpush1.msra.mxu0 %v30
  %156 = vmatprep.subr.mxu0 %v35
  %157 = vmatpush1.msra.mxu0 %v34
  %158 = vmatprep.subr.mxu0 %v39
  %159 = vmatpush1.msra.mxu0 %v38
  %160 = vmatprep.subr.mxu0 %v43
  %161 = vmatpush1.msra.mxu0 %v42
  %162 = vmatprep.subr.mxu0 %v47
  %163 = vmatpush1.msra.mxu0 %v46
  %164 = vmatprep.subr.mxu0 %v51
  %165 = vmatpush1.msra.mxu0 %v50
  %166 = vmatprep.subr.mxu0 0.0
  %167 = vmatpush1.msra.mxu0 0.0
  %168 = vmatprep.subr.mxu0 0.0
  %169 = vmatpush1.msra.mxu0 0.0
  %170 = vmatprep.subr.mxu0 0.0
  %171 = vmatpush1.msra.mxu0 0.0
  %172 = vmatprep.subr.mxu0 0.0
  %173 = vmatpush1.msra.mxu0 0.0
  %174 = vmatprep.subr.mxu0 0.0
  %175 = vmatpush1.msra.mxu0 0.0
  %176 = vmatprep.subr.mxu0 0.0
  %177 = vmatpush1.msra.mxu0 0.0
  %178 = vmatprep.subr.mxu0 0.0
  %179 = vmatpush1.msra.mxu0 0.0
  %180 = vmatprep.subr.mxu0 0.0
  %181 = vmatpush1.msra.mxu0 0.0
  %182 = vmatprep.subr.mxu0 0.0
  %183 = vmatpush1.msra.mxu0 0.0
  %184 = vmatprep.subr.mxu0 0.0
  %185 = vmatpush1.msra.mxu0 0.0
  %186 = vmatprep.subr.mxu0 0.0
  %187 = vmatpush1.msra.mxu0 0.0
  %188 = vmatprep.subr.mxu0 0.0
  %189 = vmatpush1.msra.mxu0 0.0
  %190 = vmatprep.subr.mxu0 0.0
  %191 = vmatpush1.msra.mxu0 0.0
  %192 = vmatprep.subr.mxu0 0.0
  %193 = vmatpush1.msra.mxu0 0.0
  %194 = vmatprep.subr.mxu0 0.0
  %195 = vmatpush1.msra.mxu0 0.0
  %196 = vmatprep.subr.mxu0 0.0
  %197 = vmatpush1.msra.mxu0 0.0
  %198 = vmatprep.subr.mxu0 0.0
  %199 = vmatpush1.msra.mxu0 0.0
  %200 = vmatprep.subr.mxu0 0.0
  %201 = vmatpush1.msra.mxu0 0.0
  %202 = vmatprep.subr.mxu0 0.0
  %203 = vmatpush1.msra.mxu0 0.0
  %204 = vmatprep.subr.mxu0 0.0
  %205 = vmatpush1.msra.mxu0 0.0
  %206 = vmatprep.subr.mxu0 0.0
  %207 = vmatpush1.msra.mxu0 0.0
  %208 = vmatprep.subr.mxu0 0.0
  %209 = vmatpush1.msra.mxu0 0.0
  %210 = vmatprep.subr.mxu0 0.0
  %211 = vmatpush1.msra.mxu0 0.0
  %212 = vmatprep.mubr.f32.mxu0 0.0
  %213 = vmatmul.mubr.f32.gmra.mrb[0].mxu0 %v66
  %v214 = vpop.f32.mrb[0].mxu0
  %v215 = vadd.f32 %v57, %v214
  %v216 = vpop.f32.mrb[0].mxu0
  %v217 = vadd.f32 %v57, %v216
  %218 = vmatprep.mubr.f32.mxu0 0.0
  %219 = vmatmul.mubr.f32.gmra.mrb[0].mxu0 %v69
  %v220 = vpop.f32.mrb[0].mxu0
  %v221 = vadd.f32 %v62, %v220
  %v222 = vpop.f32.mrb[0].mxu0
  %v223 = vadd.f32 %v62, %v222
  %224 = vdwg.mxu0
  %225 = vst [vmem:[%s3] sm:$0xff] %v138
  %226 = vst [vmem:[%s3 + $0x8] sm:$0xff] %v140
  %227 = vst [vmem:[%s3 + $0x10] sm:$0xff] %v215
  %228 = vst [vmem:[%s3 + $0x18] sm:$0xff] %v217
  %229 = vst [vmem:[%s3 + $0x20] sm:$0xff] %v144
  %230 = vst [vmem:[%s3 + $0x28] sm:$0xff] %v146
  %231 = vst [vmem:[%s3 + $0x30] sm:$0xff] %v221
  %232 = vst [vmem:[%s3 + $0x38] sm:$0xff] %v223
  // Predicated region
  $region14: #{forward.4} parent=0 // pred_check
    _
  $region15: #{forward.4} parent=0 // pred_check_branch
    %234 = sbr.rel (0) target = $region17
  $region16: #{forward.4} parent=0 // pred_region
    _
  $region17: #{forward.4} parent=0 // pred_fallthru
    _
  // Predicated region
  $region18: #{forward.4} parent=0 // pred_check
    _
  $region19: #{forward.4} parent=0 // pred_check_branch
    %236 = sbr.rel (0) target = $region21
  $region20: #{forward.4} parent=0 // pred_region
    _
  $region21: #{forward.4} parent=0 // pred_fallthru
    _

// kernel: forward.5
$region0: #{forward.5}
  #allocation0 [shape = 'u32[]', space=smem, size = 0x4, offset = 0x4, fixed_abs, tag = 'smem constant byte address 0x4 - core index']
  #allocation1 [shape = 'u32[144,128]{1,0:T(1,128)}', space=vmem, size = 0x12000, scoped, tag = 'internal scratch']
  %s0 = inlined_call_operand.vmem [shape: f32[32,256], index: 0, kind: input, shape index: {}]
  %s1 = inlined_call_operand.vmem [shape: f32[32,1], index: 1, kind: output, shape index: {}]
  %s2 = sld [smem:[#allocation0]]
  $region14: #{forward.5} parent=0
    _
  %s4 = ssub.s32 1, %s2
  %s5 = scalar_select 0, %s4, %s2
  // Predicated region
  $region2: #{forward.5} parent=0 // pred_check
    _
  $region3: #{forward.5} parent=0 // pred_check_branch
    %7 = sbr.rel (0) target = $region5
  $region4: #{forward.5} parent=0 // pred_region
    _
  $region5: #{forward.5} parent=0 // pred_fallthru
    _
  %v8 = vld [vmem:[%s0] sm:$0xff]
  %v9 = vld [vmem:[%s0 + $0x8] sm:$0xff]
  %v10 = vld [vmem:[%s0 + $0x10] sm:$0xff]
  %v11 = vld [vmem:[%s0 + $0x18] sm:$0xff]
  %v12 = vld [vmem:[%s0 + $0x20] sm:$0xff]
  %v13 = vld [vmem:[%s0 + $0x28] sm:$0xff]
  %v14 = vld [vmem:[%s0 + $0x30] sm:$0xff]
  %v15 = vld [vmem:[%s0 + $0x38] sm:$0xff]
  %v16 = vadd.f32 %v8, %v9
  %17 = vadd.xlane.f32.xlu0 %v16
  %v18 = vpop.xlane.xlu0 %17
  %v19 = vadd.f32 %v10, %v11
  %20 = vadd.xlane.f32.xlu0 %v19
  %v21 = vpop.xlane.xlu0 %20
  %v22 = vadd.f32 %v12, %v13
  %23 = vadd.xlane.f32.xlu0 %v22
  %v24 = vpop.xlane.xlu0 %23
  %v25 = vadd.f32 %v14, %v15
  %26 = vadd.xlane.f32.xlu0 %v25
  %v27 = vpop.xlane.xlu0 %26
  %v28 = vmul.f32 %v18, 0.00390625
  %v29 = vmul.f32 %v21, 0.00390625
  %v30 = vmul.f32 %v24, 0.00390625
  %v31 = vmul.f32 %v27, 0.00390625
  %vm32 = vcmask 7168
  %33 = vst.msk [vmem:[%s1] sm:$0xff] %vm32, %v28
  %34 = vst.msk [vmem:[%s1 + $0x8] sm:$0xff] %vm32, %v29
  %35 = vst.msk [vmem:[%s1 + $0x10] sm:$0xff] %vm32, %v30
  %36 = vst.msk [vmem:[%s1 + $0x18] sm:$0xff] %vm32, %v31
  // Predicated region
  $region6: #{forward.5} parent=0 // pred_check
    _
  $region7: #{forward.5} parent=0 // pred_check_branch
    %38 = sbr.rel (0) target = $region9
  $region8: #{forward.5} parent=0 // pred_region
    _
  $region9: #{forward.5} parent=0 // pred_fallthru
    _
  // Predicated region
  $region10: #{forward.5} parent=0 // pred_check
    _
  $region11: #{forward.5} parent=0 // pred_check_branch
    %40 = sbr.rel (0) target = $region13
  $region12: #{forward.5} parent=0 // pred_region
    _
  $region13: #{forward.5} parent=0 // pred_fallthru
    _

</llo_original>
